<compile_context>
chip_gen: v5e
topology: v5e:2x2
jax: 0.10.0
libtpu: 0.0.40
codegen_flags: <defaults>
</compile_context>

<pallas_src>
import jax
import jax.numpy as jnp
from jax.experimental import pallas as pl
from jax.experimental.pallas import tpu as pltpu

EPS = 1e-5


def bn_add_kernel(x_ref, skip_ref, gamma_ref, beta_ref, o_ref):
    # x_ref / skip_ref / o_ref : (N, C_TILE, HW)  (channels -> sublanes, HW -> lanes)
    # gamma_ref / beta_ref     : (C_TILE, 1)
    n, _, hw = x_ref.shape
    inv_m = 1.0 / (n * hw)

    # Pass 1: per-channel mean.
    mean = jnp.sum(x_ref[...].astype(jnp.float32), axis=(0, 2),
                   keepdims=True) * inv_m                                  # (1, Ct, 1)

    # Pass 2: per-channel biased variance (two-pass for numerical robustness).
    d = x_ref[...].astype(jnp.float32) - mean
    var = jnp.sum(d * d, axis=(0, 2), keepdims=True) * inv_m               # (1, Ct, 1)
    var = jnp.maximum(var, 0.0)
    inv_std = jax.lax.rsqrt(var + EPS)                                     # EUP

    # Fold per-channel constants once:  out = skip + x*a + b
    a = inv_std * gamma_ref[...].astype(jnp.float32)                       # (1, Ct, 1)
    b = beta_ref[...].astype(jnp.float32) - mean * a                       # (1, Ct, 1)

    # Pass 3 (streaming): re-read x/skip so their live ranges stay short.
    o_ref[...] = (skip_ref[...].astype(jnp.float32)
                  + x_ref[...].astype(jnp.float32) * a + b).astype(o_ref.dtype)


def _pick_c_tile(C, N, HW, itemsize):
    """Largest multiple-of-8 divisor of C that fits the VMEM budget and gives
    >= 2 grid steps (double-buffer overlap; even split across v7x's 2 TCs)."""
    vmem_budget = 16 << 20  # conservative: well under v7x 32 MiB scoped default
    per_channel = 2 * 3 * N * HW * max(itemsize, 1)   # 2 buffers x (x, skip, out)
    max_ct = (vmem_budget // per_channel) // 8 * 8
    max_ct = max(8, min(max_ct, C))
    for ct in range(max_ct, 7, -8):
        if C % ct == 0 and C // ct >= 2:
            return ct
    # No legal multi-step tiling (tiny C, or C not a multiple of 8):
    # a single full-extent channel block is always a valid tiling.
    return C


def batchnorm_add(x262, x249, gamma, beta):
    """x262, x249: NCHW arrays. Returns x249 + BatchNorm2d(x262) (batch stats)."""
    N, C, H, W = x262.shape
    HW = H * W

    # NCHW -> (N, C, H*W): trailing-dim merge only (no data movement).
    x3 = x262.reshape(N, C, HW)
    s3 = x249.reshape(N, C, HW)
    g2 = gamma.reshape(C, 1).astype(jnp.float32)
    b2 = beta.reshape(C, 1).astype(jnp.float32)

    c_tile = _pick_c_tile(C, N, HW, jnp.dtype(x262.dtype).itemsize)
    grid = (C // c_tile,)

    out_dtype = x262.dtype
    # Alias the skip input to the output: no separate HBM output allocation,
    # and in-place write when the caller donates the buffer.
    aliases = {1: 0} if (s3.dtype == out_dtype) else {}

    out = pl.pallas_call(
        bn_add_kernel,
        out_shape=jax.ShapeDtypeStruct((N, C, HW), out_dtype),
        grid=grid,
        in_specs=[
            pl.BlockSpec((N, c_tile, HW), lambda i: (0, i, 0)),
            pl.BlockSpec((N, c_tile, HW), lambda i: (0, i, 0)),
            pl.BlockSpec((c_tile, 1), lambda i: (i, 0)),
            pl.BlockSpec((c_tile, 1), lambda i: (i, 0)),
        ],
        out_specs=pl.BlockSpec((N, c_tile, HW), lambda i: (0, i, 0)),
        input_output_aliases=aliases,
        compiler_params=pltpu.CompilerParams(
            dimension_semantics=("parallel",)),
    )(x3, s3, g2, b2)

    # (N, C, H*W) -> NCHW (trailing-dim split, no data movement).
    return out.reshape(N, C, H, W)


def reference(x262, x249, gamma, beta):
    # Pure-JAX reference: training-mode BatchNorm2d + add (NCHW).
    mean = jnp.mean(x262, axis=(0, 2, 3), keepdims=True)
    var = jnp.mean((x262 - mean) ** 2, axis=(0, 2, 3), keepdims=True)
    y = (x262 - mean) / jnp.sqrt(var + EPS)
    y = y * gamma.reshape(1, -1, 1, 1) + beta.reshape(1, -1, 1, 1)
    return x249 + y


if __name__ == "__main__":
    # Module shape: 1 x 896 x 14 x 14  (C=896 -> c_tile=448, grid=(2,)).
    N, C, H, W = 1, 896, 14, 14

    key = jax.random.PRNGKey(0)
    k1, k2, k3, k4 = jax.random.split(key, 4)
    x262 = jax.random.normal(k1, (N, C, H, W), dtype=jnp.float32)
    x249 = jax.random.normal(k2, (N, C, H, W), dtype=jnp.float32)
    # Non-trivial affine params to exercise the gamma/beta path.
    gamma = 1.0 + 0.1 * jax.random.normal(k3, (C,), dtype=jnp.float32)
    beta = 0.1 * jax.random.normal(k4, (C,), dtype=jnp.float32)

    ref = reference(x262, x249, gamma, beta)

    out = batchnorm_add(x262, x249, gamma, beta)
    out = jax.block_until_ready(out)

    assert out.shape == (N, C, H, W)
    assert jnp.allclose(out, ref, atol=1e-4, rtol=1e-4), "mismatch vs reference"

    print("KERNEL_OK")
</pallas_src>

<mosaic_0001>
module attributes {stable_mosaic.version = 11 : i64} {
  func.func @bn_add_kernel(%arg0: i32, %arg1: memref<1x448x196xf32, #tpu.memory_space<vmem>>, %arg2: memref<1x448x196xf32, #tpu.memory_space<vmem>>, %arg3: memref<448x1xf32, #tpu.memory_space<vmem>>, %arg4: memref<448x1xf32, #tpu.memory_space<vmem>>, %arg5: memref<1x448x196xf32, #tpu.memory_space<vmem>>) attributes {dimension_semantics = [#tpu.dimension_semantics<parallel>], iteration_bounds = array<i64: 2>, scalar_prefetch = 0 : i64, scratch_operands = 0 : i64, tpu.core_type = #tpu.core_type<tc>, window_params = [{transform_indices = @transform_0, window_bounds = array<i64: 1, 448, 196>}, {transform_indices = @transform_1, window_bounds = array<i64: 1, 448, 196>}, {transform_indices = @transform_2, window_bounds = array<i64: 448, 1>}, {transform_indices = @transform_3, window_bounds = array<i64: 448, 1>}, {transform_indices = @transform_4, window_bounds = array<i64: 1, 448, 196>}]} {
    %c0 = arith.constant 0 : index
    %c0_0 = arith.constant 0 : index
    %c0_1 = arith.constant 0 : index
    %0 = vector.load %arg1[%c0, %c0_0, %c0_1] : memref<1x448x196xf32, #tpu.memory_space<vmem>>, vector<1x448x196xf32>
    %cst = arith.constant dense<0.000000e+00> : vector<448xf32>
    %1 = vector.multi_reduction <add>, %0, %cst [0, 2] : vector<1x448x196xf32> to vector<448xf32>
    %2 = vector.shape_cast %1 : vector<448xf32> to vector<1x448x1xf32>
    %cst_2 = arith.constant 0.00510204071 : f32
    %3 = vector.broadcast %cst_2 : f32 to vector<1x448x1xf32>
    %4 = arith.mulf %2, %3 : vector<1x448x1xf32>
    %c0_3 = arith.constant 0 : index
    %c0_4 = arith.constant 0 : index
    %c0_5 = arith.constant 0 : index
    %5 = vector.load %arg1[%c0_3, %c0_4, %c0_5] : memref<1x448x196xf32, #tpu.memory_space<vmem>>, vector<1x448x196xf32>
    %6 = vector.broadcast %4 : vector<1x448x1xf32> to vector<1x448x196xf32>
    %7 = arith.subf %5, %6 : vector<1x448x196xf32>
    %8 = arith.mulf %7, %7 : vector<1x448x196xf32>
    %cst_6 = arith.constant dense<0.000000e+00> : vector<448xf32>
    %9 = vector.multi_reduction <add>, %8, %cst_6 [0, 2] : vector<1x448x196xf32> to vector<448xf32>
    %10 = vector.shape_cast %9 : vector<448xf32> to vector<1x448x1xf32>
    %cst_7 = arith.constant 0.00510204071 : f32
    %11 = vector.broadcast %cst_7 : f32 to vector<1x448x1xf32>
    %12 = arith.mulf %10, %11 : vector<1x448x1xf32>
    %cst_8 = arith.constant 0.000000e+00 : f32
    %13 = vector.broadcast %cst_8 : f32 to vector<1x448x1xf32>
    %14 = arith.maximumf %12, %13 : vector<1x448x1xf32>
    %cst_9 = arith.constant 9.99999974E-6 : f32
    %15 = vector.broadcast %cst_9 : f32 to vector<1x448x1xf32>
    %16 = arith.addf %14, %15 : vector<1x448x1xf32>
    %17 = math.rsqrt %16 : vector<1x448x1xf32>
    %c0_10 = arith.constant 0 : index
    %c0_11 = arith.constant 0 : index
    %18 = vector.load %arg3[%c0_10, %c0_11] : memref<448x1xf32, #tpu.memory_space<vmem>>, vector<448x1xf32>
    %19 = vector.shape_cast %18 : vector<448x1xf32> to vector<1x448x1xf32>
    %20 = arith.mulf %17, %19 : vector<1x448x1xf32>
    %c0_12 = arith.constant 0 : index
    %c0_13 = arith.constant 0 : index
    %21 = vector.load %arg4[%c0_12, %c0_13] : memref<448x1xf32, #tpu.memory_space<vmem>>, vector<448x1xf32>
    %22 = arith.mulf %4, %20 : vector<1x448x1xf32>
    %23 = vector.shape_cast %21 : vector<448x1xf32> to vector<1x448x1xf32>
    %24 = arith.subf %23, %22 : vector<1x448x1xf32>
    %c0_14 = arith.constant 0 : index
    %c0_15 = arith.constant 0 : index
    %c0_16 = arith.constant 0 : index
    %25 = vector.load %arg2[%c0_14, %c0_15, %c0_16] : memref<1x448x196xf32, #tpu.memory_space<vmem>>, vector<1x448x196xf32>
    %c0_17 = arith.constant 0 : index
    %c0_18 = arith.constant 0 : index
    %c0_19 = arith.constant 0 : index
    %26 = vector.load %arg1[%c0_17, %c0_18, %c0_19] : memref<1x448x196xf32, #tpu.memory_space<vmem>>, vector<1x448x196xf32>
    %27 = vector.broadcast %20 : vector<1x448x1xf32> to vector<1x448x196xf32>
    %28 = arith.mulf %26, %27 : vector<1x448x196xf32>
    %29 = arith.addf %25, %28 : vector<1x448x196xf32>
    %30 = vector.broadcast %24 : vector<1x448x1xf32> to vector<1x448x196xf32>
    %31 = arith.addf %29, %30 : vector<1x448x196xf32>
    %c0_20 = arith.constant 0 : index
    %c0_21 = arith.constant 0 : index
    %c0_22 = arith.constant 0 : index
    %32 = vector.load %arg5[%c0_20, %c0_21, %c0_22] : memref<1x448x196xf32, #tpu.memory_space<vmem>>, vector<1x448x196xf32>
    tpu.vector_store %arg5[%c0_20, %c0_21, %c0_22], %31 {strides = array<i32>} : memref<1x448x196xf32, #tpu.memory_space<vmem>>, vector<1x448x196xf32>,
    return
  }
  func.func @transform_0(%arg0: i32) -> (i32, i32, i32) {
    %c0_i32 = arith.constant 0 : i32
    %c0_i32_0 = arith.constant 0 : i32
    %c0_i32_1 = arith.constant 0 : i32
    return %c0_i32, %arg0, %c0_i32_0 : i32, i32, i32
  }
  func.func @transform_1(%arg0: i32) -> (i32, i32, i32) {
    %c0_i32 = arith.constant 0 : i32
    %c0_i32_0 = arith.constant 0 : i32
    %c0_i32_1 = arith.constant 0 : i32
    return %c0_i32, %arg0, %c0_i32_0 : i32, i32, i32
  }
  func.func @transform_2(%arg0: i32) -> (i32, i32) {
    %c0_i32 = arith.constant 0 : i32
    %c0_i32_0 = arith.constant 0 : i32
    return %arg0, %c0_i32 : i32, i32
  }
  func.func @transform_3(%arg0: i32) -> (i32, i32) {
    %c0_i32 = arith.constant 0 : i32
    %c0_i32_0 = arith.constant 0 : i32
    return %arg0, %c0_i32 : i32, i32
  }
  func.func @transform_4(%arg0: i32) -> (i32, i32, i32) {
    %c0_i32 = arith.constant 0 : i32
    %c0_i32_0 = arith.constant 0 : i32
    %c0_i32_1 = arith.constant 0 : i32
    return %c0_i32, %arg0, %c0_i32_0 : i32, i32, i32
  }
}

</mosaic_0001>

<llo_original>
// kernel: tpu_custom_call.1
$region0: #{tpu_custom_call.1}
  #allocation0 [shape = 'u32[]', space=smem, size = 0x4, offset = 0x4, fixed_abs, tag = 'smem constant byte address 0x4 - core index']
  #allocation1 [shape = 'u32[72,128]{1,0:T(1,128)}', space=vmem, size = 0x9000, scoped, tag = 'internal scratch']
  %s0 = inlined_call_operand.vmem [shape: f32[1,896,196], index: 0, kind: input, shape index: {}]
  %s1 = inlined_call_operand.vmem [shape: f32[1,896,196], index: 1, kind: input, shape index: {}, may-alias: {1,4}]
  %s2 = inlined_call_operand.vmem [shape: f32[896,1], index: 2, kind: input, shape index: {}]
  %s3 = inlined_call_operand.vmem [shape: f32[896,1], index: 3, kind: input, shape index: {}]
  %s4 = inlined_call_operand.vmem [shape: f32[1,896,196], index: 4, kind: output, shape index: {}, may-alias: {1,4}]
  %s5 = sld [smem:[#allocation0]]
  $region49: #{tpu_custom_call.1} parent=0
    _
  %s7 = ssub.s32 1, %s5
  %s8 = scalar_select 0, %s7, %s5
  loop: start=0, step=1, limit=4
  $region2: #{tpu_custom_call.1} parent=0 // loop_pre_header
    _
  $region3: #{tpu_custom_call.1} parent=0 // loop_header
    %s10 = sphi 0, %s14
    %p11 = scmp.ge.s32.totalorder %s10, 4
    %s20 = sphi 0, %s22
    %s23 = sphi 0, %s20
    %s24 = sphi 0, %s23
    %s40 = sphi 0, %s24
    %s46 = sphi 0, %s48
    %s49 = sphi 0, %s46
    %s50 = sphi 0, %s49
    %s66 = sphi 0, %s50
    %s72 = sphi 0, %s74
    %s75 = sphi 0, %s72
    %s76 = sphi 0, %s75
    %s92 = sphi 0, %s76
    %s98 = sphi 0, %s100
    %s101 = sphi 0, %s98
    %s102 = sphi 0, %s101
    %s118 = sphi 0, %s102
    %s124 = sphi 0, %s126
    %s127 = sphi 0, %s124
    %s128 = sphi 0, %s127
    %s144 = sphi 0, %s128
  $region4: #{tpu_custom_call.1} parent=0 // loop_header_branch
    %13 = sbr.rel (%p11) target = $region8
  $region5: #{tpu_custom_call.1} parent=0 // loop_body
    %s15 = ssub.s32 %s10, 1
    %s16 = ssub.s32 %s10, 2
    %s17 = sadd.s32 %s10, 1
    %s18 = ssub.s32 %s10, %s17
    %p19 = scmp.eq.s32.totalorder %s18, 0
    %s21 = sadd.s32 %s20, 1
    %s22 = scalar_select %p19, %s20, %s21
    %p25 = pneg %p19
    %p26 = scmp.eq.s32.totalorder %s10, 1
    %p27 = por %p25, %p26
    %p28 = scmp.ne.s32.totalorder %s20, %s23
    %p29 = scmp.eq.s32.totalorder %s10, 0
    %p30 = por %p28, %p29
    %p31 = scmp.ne.s32.totalorder %s20, %s23
    %p32 = scmp.eq.s32.totalorder %s15, 1
    %p33 = por %p31, %p32
    %p34 = scmp.ne.s32.totalorder %s23, %s24
    %p35 = scmp.eq.s32.totalorder %s15, 0
    %p36 = por %p34, %p35
    %p37 = scmp.ne.s32.totalorder %s23, %s24
    %p38 = scmp.eq.s32.totalorder %s16, 1
    %p39 = por %p37, %p38
    %p41 = scmp.ne.s32.totalorder %s24, %s40
    %p42 = scmp.eq.s32.totalorder %s16, 0
    %p43 = por %p41, %p42
    %s44 = ssub.s32 %s10, %s17
    %p45 = scmp.eq.s32.totalorder %s44, 0
    %s47 = sadd.s32 %s46, 1
    %s48 = scalar_select %p45, %s46, %s47
    %p51 = pneg %p45
    %p52 = scmp.eq.s32.totalorder %s10, 1
    %p53 = por %p51, %p52
    %p54 = scmp.ne.s32.totalorder %s46, %s49
    %p55 = scmp.eq.s32.totalorder %s10, 0
    %p56 = por %p54, %p55
    %p57 = scmp.ne.s32.totalorder %s46, %s49
    %p58 = scmp.eq.s32.totalorder %s15, 1
    %p59 = por %p57, %p58
    %p60 = scmp.ne.s32.totalorder %s49, %s50
    %p61 = scmp.eq.s32.totalorder %s15, 0
    %p62 = por %p60, %p61
    %p63 = scmp.ne.s32.totalorder %s49, %s50
    %p64 = scmp.eq.s32.totalorder %s16, 1
    %p65 = por %p63, %p64
    %p67 = scmp.ne.s32.totalorder %s50, %s66
    %p68 = scmp.eq.s32.totalorder %s16, 0
    %p69 = por %p67, %p68
    %s70 = ssub.s32 %s10, %s17
    %p71 = scmp.eq.s32.totalorder %s70, 0
    %s73 = sadd.s32 %s72, 1
    %s74 = scalar_select %p71, %s72, %s73
    %p77 = pneg %p71
    %p78 = scmp.eq.s32.totalorder %s10, 1
    %p79 = por %p77, %p78
    %p80 = scmp.ne.s32.totalorder %s72, %s75
    %p81 = scmp.eq.s32.totalorder %s10, 0
    %p82 = por %p80, %p81
    %p83 = scmp.ne.s32.totalorder %s72, %s75
    %p84 = scmp.eq.s32.totalorder %s15, 1
    %p85 = por %p83, %p84
    %p86 = scmp.ne.s32.totalorder %s75, %s76
    %p87 = scmp.eq.s32.totalorder %s15, 0
    %p88 = por %p86, %p87
    %p89 = scmp.ne.s32.totalorder %s75, %s76
    %p90 = scmp.eq.s32.totalorder %s16, 1
    %p91 = por %p89, %p90
    %p93 = scmp.ne.s32.totalorder %s76, %s92
    %p94 = scmp.eq.s32.totalorder %s16, 0
    %p95 = por %p93, %p94
    %s96 = ssub.s32 %s10, %s17
    %p97 = scmp.eq.s32.totalorder %s96, 0
    %s99 = sadd.s32 %s98, 1
    %s100 = scalar_select %p97, %s98, %s99
    %p103 = pneg %p97
    %p104 = scmp.eq.s32.totalorder %s10, 1
    %p105 = por %p103, %p104
    %p106 = scmp.ne.s32.totalorder %s98, %s101
    %p107 = scmp.eq.s32.totalorder %s10, 0
    %p108 = por %p106, %p107
    %p109 = scmp.ne.s32.totalorder %s98, %s101
    %p110 = scmp.eq.s32.totalorder %s15, 1
    %p111 = por %p109, %p110
    %p112 = scmp.ne.s32.totalorder %s101, %s102
    %p113 = scmp.eq.s32.totalorder %s15, 0
    %p114 = por %p112, %p113
    %p115 = scmp.ne.s32.totalorder %s101, %s102
    %p116 = scmp.eq.s32.totalorder %s16, 1
    %p117 = por %p115, %p116
    %p119 = scmp.ne.s32.totalorder %s102, %s118
    %p120 = scmp.eq.s32.totalorder %s16, 0
    %p121 = por %p119, %p120
    %s122 = ssub.s32 %s10, %s17
    %p123 = scmp.eq.s32.totalorder %s122, 0
    %s125 = sadd.s32 %s124, 1
    %s126 = scalar_select %p123, %s124, %s125
    %p129 = pneg %p123
    %p130 = scmp.eq.s32.totalorder %s10, 1
    %p131 = por %p129, %p130
    %p132 = scmp.ne.s32.totalorder %s124, %s127
    %p133 = scmp.eq.s32.totalorder %s10, 0
    %p134 = por %p132, %p133
    %p135 = scmp.ne.s32.totalorder %s124, %s127
    %p136 = scmp.eq.s32.totalorder %s15, 1
    %p137 = por %p135, %p136
    %p138 = scmp.ne.s32.totalorder %s127, %s128
    %p139 = scmp.eq.s32.totalorder %s15, 0
    %p140 = por %p138, %p139
    %p141 = scmp.ne.s32.totalorder %s127, %s128
    %p142 = scmp.eq.s32.totalorder %s16, 1
    %p143 = por %p141, %p142
    %p145 = scmp.ne.s32.totalorder %s128, %s144
    %p146 = scmp.eq.s32.totalorder %s16, 0
    %p147 = por %p145, %p146
    %p148 = scmp.le.s32.totalorder 1, %s10
    %p149 = scmp.lt.s32.totalorder %s10, 3
    %p150 = pnand %p148, %p149
    %p151 = pneg %p150
    // Predicated region
    $region9: #{tpu_custom_call.1} parent=5 // pred_check
      _
    $region10: #{tpu_custom_call.1} parent=5 // pred_check_branch
      %153 = sbr.rel (%p150) target = $region12
    $region11: #{tpu_custom_call.1} parent=5 // pred_region
      %s154 = ssub.s32 %s10, 1
    $region12: #{tpu_custom_call.1} parent=5 // pred_fallthru
      _
    %p155 = scmp.lt.s32.totalorder %s10, 2
    // Predicated region
    $region13: #{tpu_custom_call.1} parent=5 // pred_check
      %p156 = pneg %p155
    $region14: #{tpu_custom_call.1} parent=5 // pred_check_branch
      %158 = sbr.rel (%p156) target = $region16
    $region15: #{tpu_custom_call.1} parent=5 // pred_region
      // Predicated region
      $region17: #{tpu_custom_call.1} parent=15 // pred_check
        %p159 = pneg %p30
      $region18: #{tpu_custom_call.1} parent=15 // pred_check_branch
        %161 = sbr.rel (%p159) target = $region20
      $region19: #{tpu_custom_call.1} parent=15 // pred_region
        %s162 = smul.u32 56, %s10
        %p163 = scmp.lt.s32.totalorder %s162, 111
        %s164 = scalar_select %p163, %s162, 111
        %s165 = smul.addr %s164, 2
        %s166 = smul.addr %s165, 8
        %s167 = scalar_lea.vmem %s0, %s166
        %s168 = smul.u32 56, %s10
      $region20: #{tpu_custom_call.1} parent=15 // pred_fallthru
        _
      // Predicated region
      $region21: #{tpu_custom_call.1} parent=15 // pred_check
        %p169 = pneg %p56
      $region22: #{tpu_custom_call.1} parent=15 // pred_check_branch
        %171 = sbr.rel (%p169) target = $region24
      $region23: #{tpu_custom_call.1} parent=15 // pred_region
        %s172 = smul.u32 56, %s10
        %p173 = scmp.lt.s32.totalorder %s172, 111
        %s174 = scalar_select %p173, %s172, 111
        %s175 = smul.addr %s174, 2
        %s176 = smul.addr %s175, 8
        %s177 = scalar_lea.vmem %s1, %s176
        %s178 = smul.u32 56, %s10
      $region24: #{tpu_custom_call.1} parent=15 // pred_fallthru
        _
      // Predicated region
      $region25: #{tpu_custom_call.1} parent=15 // pred_check
        %p179 = pneg %p82
      $region26: #{tpu_custom_call.1} parent=15 // pred_check_branch
        %181 = sbr.rel (%p179) target = $region28
      $region27: #{tpu_custom_call.1} parent=15 // pred_region
        %s182 = smul.u32 56, %s10
        %p183 = scmp.lt.s32.totalorder %s182, 111
        %s184 = scalar_select %p183, %s182, 111
        %s185 = smul.addr %s184, 8
        %s186 = scalar_lea.vmem %s2, %s185
        %s187 = smul.u32 56, %s10
      $region28: #{tpu_custom_call.1} parent=15 // pred_fallthru
        _
      // Predicated region
      $region29: #{tpu_custom_call.1} parent=15 // pred_check
        %p188 = pneg %p108
      $region30: #{tpu_custom_call.1} parent=15 // pred_check_branch
        %190 = sbr.rel (%p188) target = $region32
      $region31: #{tpu_custom_call.1} parent=15 // pred_region
        %s191 = smul.u32 56, %s10
        %p192 = scmp.lt.s32.totalorder %s191, 111
        %s193 = scalar_select %p192, %s191, 111
        %s194 = smul.addr %s193, 8
        %s195 = scalar_lea.vmem %s3, %s194
        %s196 = smul.u32 56, %s10
      $region32: #{tpu_custom_call.1} parent=15 // pred_fallthru
        _
    $region16: #{tpu_custom_call.1} parent=5 // pred_fallthru
      _
    %p197 = scmp.le.s32.totalorder 1, %s10
    %p198 = scmp.lt.s32.totalorder %s10, 3
    %p199 = pnand %p197, %p198
    %p200 = pneg %p199
    // Predicated region
    $region33: #{tpu_custom_call.1} parent=5 // pred_check
      _
    $region34: #{tpu_custom_call.1} parent=5 // pred_check_branch
      %202 = sbr.rel (%p199) target = $region36
    $region35: #{tpu_custom_call.1} parent=5 // pred_region
      %s203 = ssub.s32 %s10, 1
      %s204 = smul.u32 56, %s15
      %p205 = scmp.lt.s32.totalorder %s204, 111
      %s206 = scalar_select %p205, %s204, 111
      %s207 = smul.addr %s206, 2
      %s208 = smul.addr %s207, 8
      %s209 = scalar_lea.vmem %s0, %s208
      %p210 = pneg %p36
      %p211 = pneg %p33
      %s212 = smul.u32 56, %s15
      %p213 = scmp.lt.s32.totalorder %s212, 111
      %s214 = scalar_select %p213, %s212, 111
      %s215 = smul.addr %s214, 2
      %s216 = smul.addr %s215, 8
      %s217 = scalar_lea.vmem %s1, %s216
      %p218 = pneg %p62
      %p219 = pneg %p59
      %s220 = smul.u32 56, %s15
      %p221 = scmp.lt.s32.totalorder %s220, 111
      %s222 = scalar_select %p221, %s220, 111
      %s223 = smul.addr %s222, 8
      %s224 = scalar_lea.vmem %s2, %s223
      %p225 = pneg %p88
      %p226 = pneg %p85
      %s227 = smul.u32 56, %s15
      %p228 = scmp.lt.s32.totalorder %s227, 111
      %s229 = scalar_select %p228, %s227, 111
      %s230 = smul.addr %s229, 8
      %s231 = scalar_lea.vmem %s3, %s230
      %p232 = pneg %p114
      %p233 = pneg %p111
      %p234 = pneg %p140
      %p235 = pneg %p137
      %s236 = smul.u32 56, %s15
      %p237 = scmp.lt.s32.totalorder %s236, 111
      %s238 = scalar_select %p237, %s236, 111
      %s239 = smul.addr %s238, 2
      %s240 = smul.addr %s239, 8
      %s241 = scalar_lea.vmem %s4, %s240
      %s242 = smul.u32 56, %s15
      %p243 = scmp.lt.s32.totalorder %s242, 111
      %s244 = scalar_select %p243, %s242, 111
      %s245 = smul.addr %s244, 2
      %s246 = smul.addr %s245, 8
      %s247 = scalar_lea.vmem %s0, %s246
      %s248 = smul.u32 56, %s15
      %s249 = smul.u32 56, %s15
      %p250 = scmp.lt.s32.totalorder %s249, 111
      %s251 = scalar_select %p250, %s249, 111
      %s252 = smul.addr %s251, 2
      %s253 = smul.addr %s252, 8
      %s254 = scalar_lea.vmem %s1, %s253
      %s255 = smul.u32 56, %s15
      %s256 = smul.u32 56, %s15
      %p257 = scmp.lt.s32.totalorder %s256, 111
      %s258 = scalar_select %p257, %s256, 111
      %s259 = smul.addr %s258, 8
      %s260 = scalar_lea.vmem %s2, %s259
      %s261 = smul.u32 56, %s15
      %s262 = smul.u32 56, %s15
      %p263 = scmp.lt.s32.totalorder %s262, 111
      %s264 = scalar_select %p263, %s262, 111
      %s265 = smul.addr %s264, 8
      %s266 = scalar_lea.vmem %s3, %s265
      %s267 = smul.u32 56, %s15
      %s268 = smul.u32 56, %s15
      %p269 = scmp.lt.s32.totalorder %s268, 111
      %s270 = scalar_select %p269, %s268, 111
      %s271 = smul.addr %s270, 2
      %s272 = smul.addr %s271, 8
      %s273 = scalar_lea.vmem %s4, %s272
      %s274 = smul.u32 56, %s15
      %v275 = vld [vmem:[%s247] sm:$0xff]
      %v276 = vld [vmem:[%s247 + $0x8] sm:$0xff]
      %v277 = vld [vmem:[%s247 + $0x10] sm:$0xff]
      %v278 = vld [vmem:[%s247 + $0x18] sm:$0xff]
      %v279 = vld [vmem:[%s247 + $0x20] sm:$0xff]
      %v280 = vld [vmem:[%s247 + $0x28] sm:$0xff]
      %v281 = vld [vmem:[%s247 + $0x30] sm:$0xff]
      %v282 = vld [vmem:[%s247 + $0x38] sm:$0xff]
      %v283 = vld [vmem:[%s247 + $0x40] sm:$0xff]
      %v284 = vld [vmem:[%s247 + $0x48] sm:$0xff]
      %v285 = vld [vmem:[%s247 + $0x50] sm:$0xff]
      %v286 = vld [vmem:[%s247 + $0x58] sm:$0xff]
      %v287 = vld [vmem:[%s247 + $0x60] sm:$0xff]
      %v288 = vld [vmem:[%s247 + $0x68] sm:$0xff]
      %v289 = vld [vmem:[%s247 + $0x70] sm:$0xff]
      %v290 = vld [vmem:[%s247 + $0x78] sm:$0xff]
      %v291 = vld [vmem:[%s247 + $0x80] sm:$0xff]
      %v292 = vld [vmem:[%s247 + $0x88] sm:$0xff]
      %v293 = vld [vmem:[%s247 + $0x90] sm:$0xff]
      %v294 = vld [vmem:[%s247 + $0x98] sm:$0xff]
      %v295 = vld [vmem:[%s247 + $0xa0] sm:$0xff]
      %v296 = vld [vmem:[%s247 + $0xa8] sm:$0xff]
      %v297 = vld [vmem:[%s247 + $0xb0] sm:$0xff]
      %v298 = vld [vmem:[%s247 + $0xb8] sm:$0xff]
      %v299 = vld [vmem:[%s247 + $0xc0] sm:$0xff]
      %v300 = vld [vmem:[%s247 + $0xc8] sm:$0xff]
      %v301 = vld [vmem:[%s247 + $0xd0] sm:$0xff]
      %v302 = vld [vmem:[%s247 + $0xd8] sm:$0xff]
      %v303 = vld [vmem:[%s247 + $0xe0] sm:$0xff]
      %v304 = vld [vmem:[%s247 + $0xe8] sm:$0xff]
      %v305 = vld [vmem:[%s247 + $0xf0] sm:$0xff]
      %v306 = vld [vmem:[%s247 + $0xf8] sm:$0xff]
      %v307 = vld [vmem:[%s247 + $0x100] sm:$0xff]
      %v308 = vld [vmem:[%s247 + $0x108] sm:$0xff]
      %v309 = vld [vmem:[%s247 + $0x110] sm:$0xff]
      %v310 = vld [vmem:[%s247 + $0x118] sm:$0xff]
      %v311 = vld [vmem:[%s247 + $0x120] sm:$0xff]
      %v312 = vld [vmem:[%s247 + $0x128] sm:$0xff]
      %v313 = vld [vmem:[%s247 + $0x130] sm:$0xff]
      %v314 = vld [vmem:[%s247 + $0x138] sm:$0xff]
      %v315 = vld [vmem:[%s247 + $0x140] sm:$0xff]
      %v316 = vld [vmem:[%s247 + $0x148] sm:$0xff]
      %v317 = vld [vmem:[%s247 + $0x150] sm:$0xff]
      %v318 = vld [vmem:[%s247 + $0x158] sm:$0xff]
      %v319 = vld [vmem:[%s247 + $0x160] sm:$0xff]
      %v320 = vld [vmem:[%s247 + $0x168] sm:$0xff]
      %v321 = vld [vmem:[%s247 + $0x170] sm:$0xff]
      %v322 = vld [vmem:[%s247 + $0x178] sm:$0xff]
      %v323 = vld [vmem:[%s247 + $0x180] sm:$0xff]
      %v324 = vld [vmem:[%s247 + $0x188] sm:$0xff]
      %v325 = vld [vmem:[%s247 + $0x190] sm:$0xff]
      %v326 = vld [vmem:[%s247 + $0x198] sm:$0xff]
      %v327 = vld [vmem:[%s247 + $0x1a0] sm:$0xff]
      %v328 = vld [vmem:[%s247 + $0x1a8] sm:$0xff]
      %v329 = vld [vmem:[%s247 + $0x1b0] sm:$0xff]
      %v330 = vld [vmem:[%s247 + $0x1b8] sm:$0xff]
      %v331 = vld [vmem:[%s247 + $0x1c0] sm:$0xff]
      %v332 = vld [vmem:[%s247 + $0x1c8] sm:$0xff]
      %v333 = vld [vmem:[%s247 + $0x1d0] sm:$0xff]
      %v334 = vld [vmem:[%s247 + $0x1d8] sm:$0xff]
      %v335 = vld [vmem:[%s247 + $0x1e0] sm:$0xff]
      %v336 = vld [vmem:[%s247 + $0x1e8] sm:$0xff]
      %v337 = vld [vmem:[%s247 + $0x1f0] sm:$0xff]
      %v338 = vld [vmem:[%s247 + $0x1f8] sm:$0xff]
      %v339 = vld [vmem:[%s247 + $0x200] sm:$0xff]
      %v340 = vld [vmem:[%s247 + $0x208] sm:$0xff]
      %v341 = vld [vmem:[%s247 + $0x210] sm:$0xff]
      %v342 = vld [vmem:[%s247 + $0x218] sm:$0xff]
      %v343 = vld [vmem:[%s247 + $0x220] sm:$0xff]
      %v344 = vld [vmem:[%s247 + $0x228] sm:$0xff]
      %v345 = vld [vmem:[%s247 + $0x230] sm:$0xff]
      %v346 = vld [vmem:[%s247 + $0x238] sm:$0xff]
      %v347 = vld [vmem:[%s247 + $0x240] sm:$0xff]
      %v348 = vld [vmem:[%s247 + $0x248] sm:$0xff]
      %v349 = vld [vmem:[%s247 + $0x250] sm:$0xff]
      %v350 = vld [vmem:[%s247 + $0x258] sm:$0xff]
      %v351 = vld [vmem:[%s247 + $0x260] sm:$0xff]
      %v352 = vld [vmem:[%s247 + $0x268] sm:$0xff]
      %v353 = vld [vmem:[%s247 + $0x270] sm:$0xff]
      %v354 = vld [vmem:[%s247 + $0x278] sm:$0xff]
      %v355 = vld [vmem:[%s247 + $0x280] sm:$0xff]
      %v356 = vld [vmem:[%s247 + $0x288] sm:$0xff]
      %v357 = vld [vmem:[%s247 + $0x290] sm:$0xff]
      %v358 = vld [vmem:[%s247 + $0x298] sm:$0xff]
      %v359 = vld [vmem:[%s247 + $0x2a0] sm:$0xff]
      %v360 = vld [vmem:[%s247 + $0x2a8] sm:$0xff]
      %v361 = vld [vmem:[%s247 + $0x2b0] sm:$0xff]
      %v362 = vld [vmem:[%s247 + $0x2b8] sm:$0xff]
      %v363 = vld [vmem:[%s247 + $0x2c0] sm:$0xff]
      %v364 = vld [vmem:[%s247 + $0x2c8] sm:$0xff]
      %v365 = vld [vmem:[%s247 + $0x2d0] sm:$0xff]
      %v366 = vld [vmem:[%s247 + $0x2d8] sm:$0xff]
      %v367 = vld [vmem:[%s247 + $0x2e0] sm:$0xff]
      %v368 = vld [vmem:[%s247 + $0x2e8] sm:$0xff]
      %v369 = vld [vmem:[%s247 + $0x2f0] sm:$0xff]
      %v370 = vld [vmem:[%s247 + $0x2f8] sm:$0xff]
      %v371 = vld [vmem:[%s247 + $0x300] sm:$0xff]
      %v372 = vld [vmem:[%s247 + $0x308] sm:$0xff]
      %v373 = vld [vmem:[%s247 + $0x310] sm:$0xff]
      %v374 = vld [vmem:[%s247 + $0x318] sm:$0xff]
      %v375 = vld [vmem:[%s247 + $0x320] sm:$0xff]
      %v376 = vld [vmem:[%s247 + $0x328] sm:$0xff]
      %v377 = vld [vmem:[%s247 + $0x330] sm:$0xff]
      %v378 = vld [vmem:[%s247 + $0x338] sm:$0xff]
      %v379 = vld [vmem:[%s247 + $0x340] sm:$0xff]
      %v380 = vld [vmem:[%s247 + $0x348] sm:$0xff]
      %v381 = vld [vmem:[%s247 + $0x350] sm:$0xff]
      %v382 = vld [vmem:[%s247 + $0x358] sm:$0xff]
      %v383 = vld [vmem:[%s247 + $0x360] sm:$0xff]
      %v384 = vld [vmem:[%s247 + $0x368] sm:$0xff]
      %v385 = vld [vmem:[%s247 + $0x370] sm:$0xff]
      %v386 = vld [vmem:[%s247 + $0x378] sm:$0xff]
      %vm387 = vcmask 556032
      %v388 = vsel %vm387, %v276, 0.0
      %v389 = vadd.f32 %v275, %v388
      %390 = vadd.xlane.f32.xlu0 %v389
      %v391 = vpop.xlane.xlu0 %390
      %v392 = vsel %vm387, %v278, 0.0
      %v393 = vadd.f32 %v277, %v392
      %394 = vadd.xlane.f32.xlu0 %v393
      %v395 = vpop.xlane.xlu0 %394
      %v396 = vsel %vm387, %v280, 0.0
      %v397 = vadd.f32 %v279, %v396
      %398 = vadd.xlane.f32.xlu0 %v397
      %v399 = vpop.xlane.xlu0 %398
      %v400 = vsel %vm387, %v282, 0.0
      %v401 = vadd.f32 %v281, %v400
      %402 = vadd.xlane.f32.xlu0 %v401
      %v403 = vpop.xlane.xlu0 %402
      %v404 = vsel %vm387, %v284, 0.0
      %v405 = vadd.f32 %v283, %v404
      %406 = vadd.xlane.f32.xlu0 %v405
      %v407 = vpop.xlane.xlu0 %406
      %v408 = vsel %vm387, %v286, 0.0
      %v409 = vadd.f32 %v285, %v408
      %410 = vadd.xlane.f32.xlu0 %v409
      %v411 = vpop.xlane.xlu0 %410
      %v412 = vsel %vm387, %v288, 0.0
      %v413 = vadd.f32 %v287, %v412
      %414 = vadd.xlane.f32.xlu0 %v413
      %v415 = vpop.xlane.xlu0 %414
      %v416 = vsel %vm387, %v290, 0.0
      %v417 = vadd.f32 %v289, %v416
      %418 = vadd.xlane.f32.xlu0 %v417
      %v419 = vpop.xlane.xlu0 %418
      %v420 = vsel %vm387, %v292, 0.0
      %v421 = vadd.f32 %v291, %v420
      %422 = vadd.xlane.f32.xlu0 %v421
      %v423 = vpop.xlane.xlu0 %422
      %v424 = vsel %vm387, %v294, 0.0
      %v425 = vadd.f32 %v293, %v424
      %426 = vadd.xlane.f32.xlu0 %v425
      %v427 = vpop.xlane.xlu0 %426
      %v428 = vsel %vm387, %v296, 0.0
      %v429 = vadd.f32 %v295, %v428
      %430 = vadd.xlane.f32.xlu0 %v429
      %v431 = vpop.xlane.xlu0 %430
      %v432 = vsel %vm387, %v298, 0.0
      %v433 = vadd.f32 %v297, %v432
      %434 = vadd.xlane.f32.xlu0 %v433
      %v435 = vpop.xlane.xlu0 %434
      %v436 = vsel %vm387, %v300, 0.0
      %v437 = vadd.f32 %v299, %v436
      %438 = vadd.xlane.f32.xlu0 %v437
      %v439 = vpop.xlane.xlu0 %438
      %v440 = vsel %vm387, %v302, 0.0
      %v441 = vadd.f32 %v301, %v440
      %442 = vadd.xlane.f32.xlu0 %v441
      %v443 = vpop.xlane.xlu0 %442
      %v444 = vsel %vm387, %v304, 0.0
      %v445 = vadd.f32 %v303, %v444
      %446 = vadd.xlane.f32.xlu0 %v445
      %v447 = vpop.xlane.xlu0 %446
      %v448 = vsel %vm387, %v306, 0.0
      %v449 = vadd.f32 %v305, %v448
      %450 = vadd.xlane.f32.xlu0 %v449
      %v451 = vpop.xlane.xlu0 %450
      %v452 = vsel %vm387, %v308, 0.0
      %v453 = vadd.f32 %v307, %v452
      %454 = vadd.xlane.f32.xlu0 %v453
      %v455 = vpop.xlane.xlu0 %454
      %v456 = vsel %vm387, %v310, 0.0
      %v457 = vadd.f32 %v309, %v456
      %458 = vadd.xlane.f32.xlu0 %v457
      %v459 = vpop.xlane.xlu0 %458
      %v460 = vsel %vm387, %v312, 0.0
      %v461 = vadd.f32 %v311, %v460
      %462 = vadd.xlane.f32.xlu0 %v461
      %v463 = vpop.xlane.xlu0 %462
      %v464 = vsel %vm387, %v314, 0.0
      %v465 = vadd.f32 %v313, %v464
      %466 = vadd.xlane.f32.xlu0 %v465
      %v467 = vpop.xlane.xlu0 %466
      %v468 = vsel %vm387, %v316, 0.0
      %v469 = vadd.f32 %v315, %v468
      %470 = vadd.xlane.f32.xlu0 %v469
      %v471 = vpop.xlane.xlu0 %470
      %v472 = vsel %vm387, %v318, 0.0
      %v473 = vadd.f32 %v317, %v472
      %474 = vadd.xlane.f32.xlu0 %v473
      %v475 = vpop.xlane.xlu0 %474
      %v476 = vsel %vm387, %v320, 0.0
      %v477 = vadd.f32 %v319, %v476
      %478 = vadd.xlane.f32.xlu0 %v477
      %v479 = vpop.xlane.xlu0 %478
      %v480 = vsel %vm387, %v322, 0.0
      %v481 = vadd.f32 %v321, %v480
      %482 = vadd.xlane.f32.xlu0 %v481
      %v483 = vpop.xlane.xlu0 %482
      %v484 = vsel %vm387, %v324, 0.0
      %v485 = vadd.f32 %v323, %v484
      %486 = vadd.xlane.f32.xlu0 %v485
      %v487 = vpop.xlane.xlu0 %486
      %v488 = vsel %vm387, %v326, 0.0
      %v489 = vadd.f32 %v325, %v488
      %490 = vadd.xlane.f32.xlu0 %v489
      %v491 = vpop.xlane.xlu0 %490
      %v492 = vsel %vm387, %v328, 0.0
      %v493 = vadd.f32 %v327, %v492
      %494 = vadd.xlane.f32.xlu0 %v493
      %v495 = vpop.xlane.xlu0 %494
      %v496 = vsel %vm387, %v330, 0.0
      %v497 = vadd.f32 %v329, %v496
      %498 = vadd.xlane.f32.xlu0 %v497
      %v499 = vpop.xlane.xlu0 %498
      %v500 = vsel %vm387, %v332, 0.0
      %v501 = vadd.f32 %v331, %v500
      %502 = vadd.xlane.f32.xlu0 %v501
      %v503 = vpop.xlane.xlu0 %502
      %v504 = vsel %vm387, %v334, 0.0
      %v505 = vadd.f32 %v333, %v504
      %506 = vadd.xlane.f32.xlu0 %v505
      %v507 = vpop.xlane.xlu0 %506
      %v508 = vsel %vm387, %v336, 0.0
      %v509 = vadd.f32 %v335, %v508
      %510 = vadd.xlane.f32.xlu0 %v509
      %v511 = vpop.xlane.xlu0 %510
      %v512 = vsel %vm387, %v338, 0.0
      %v513 = vadd.f32 %v337, %v512
      %514 = vadd.xlane.f32.xlu0 %v513
      %v515 = vpop.xlane.xlu0 %514
      %v516 = vsel %vm387, %v340, 0.0
      %v517 = vadd.f32 %v339, %v516
      %518 = vadd.xlane.f32.xlu0 %v517
      %v519 = vpop.xlane.xlu0 %518
      %v520 = vsel %vm387, %v342, 0.0
      %v521 = vadd.f32 %v341, %v520
      %522 = vadd.xlane.f32.xlu0 %v521
      %v523 = vpop.xlane.xlu0 %522
      %v524 = vsel %vm387, %v344, 0.0
      %v525 = vadd.f32 %v343, %v524
      %526 = vadd.xlane.f32.xlu0 %v525
      %v527 = vpop.xlane.xlu0 %526
      %v528 = vsel %vm387, %v346, 0.0
      %v529 = vadd.f32 %v345, %v528
      %530 = vadd.xlane.f32.xlu0 %v529
      %v531 = vpop.xlane.xlu0 %530
      %v532 = vsel %vm387, %v348, 0.0
      %v533 = vadd.f32 %v347, %v532
      %534 = vadd.xlane.f32.xlu0 %v533
      %v535 = vpop.xlane.xlu0 %534
      %v536 = vsel %vm387, %v350, 0.0
      %v537 = vadd.f32 %v349, %v536
      %538 = vadd.xlane.f32.xlu0 %v537
      %v539 = vpop.xlane.xlu0 %538
      %v540 = vsel %vm387, %v352, 0.0
      %v541 = vadd.f32 %v351, %v540
      %542 = vadd.xlane.f32.xlu0 %v541
      %v543 = vpop.xlane.xlu0 %542
      %v544 = vsel %vm387, %v354, 0.0
      %v545 = vadd.f32 %v353, %v544
      %546 = vadd.xlane.f32.xlu0 %v545
      %v547 = vpop.xlane.xlu0 %546
      %v548 = vsel %vm387, %v356, 0.0
      %v549 = vadd.f32 %v355, %v548
      %550 = vadd.xlane.f32.xlu0 %v549
      %v551 = vpop.xlane.xlu0 %550
      %v552 = vsel %vm387, %v358, 0.0
      %v553 = vadd.f32 %v357, %v552
      %554 = vadd.xlane.f32.xlu0 %v553
      %v555 = vpop.xlane.xlu0 %554
      %v556 = vsel %vm387, %v360, 0.0
      %v557 = vadd.f32 %v359, %v556
      %558 = vadd.xlane.f32.xlu0 %v557
      %v559 = vpop.xlane.xlu0 %558
      %v560 = vsel %vm387, %v362, 0.0
      %v561 = vadd.f32 %v361, %v560
      %562 = vadd.xlane.f32.xlu0 %v561
      %v563 = vpop.xlane.xlu0 %562
      %v564 = vsel %vm387, %v364, 0.0
      %v565 = vadd.f32 %v363, %v564
      %566 = vadd.xlane.f32.xlu0 %v565
      %v567 = vpop.xlane.xlu0 %566
      %v568 = vsel %vm387, %v366, 0.0
      %v569 = vadd.f32 %v365, %v568
      %570 = vadd.xlane.f32.xlu0 %v569
      %v571 = vpop.xlane.xlu0 %570
      %v572 = vsel %vm387, %v368, 0.0
      %v573 = vadd.f32 %v367, %v572
      %574 = vadd.xlane.f32.xlu0 %v573
      %v575 = vpop.xlane.xlu0 %574
      %v576 = vsel %vm387, %v370, 0.0
      %v577 = vadd.f32 %v369, %v576
      %578 = vadd.xlane.f32.xlu0 %v577
      %v579 = vpop.xlane.xlu0 %578
      %v580 = vsel %vm387, %v372, 0.0
      %v581 = vadd.f32 %v371, %v580
      %582 = vadd.xlane.f32.xlu0 %v581
      %v583 = vpop.xlane.xlu0 %582
      %v584 = vsel %vm387, %v374, 0.0
      %v585 = vadd.f32 %v373, %v584
      %586 = vadd.xlane.f32.xlu0 %v585
      %v587 = vpop.xlane.xlu0 %586
      %v588 = vsel %vm387, %v376, 0.0
      %v589 = vadd.f32 %v375, %v588
      %590 = vadd.xlane.f32.xlu0 %v589
      %v591 = vpop.xlane.xlu0 %590
      %v592 = vsel %vm387, %v378, 0.0
      %v593 = vadd.f32 %v377, %v592
      %594 = vadd.xlane.f32.xlu0 %v593
      %v595 = vpop.xlane.xlu0 %594
      %v596 = vsel %vm387, %v380, 0.0
      %v597 = vadd.f32 %v379, %v596
      %598 = vadd.xlane.f32.xlu0 %v597
      %v599 = vpop.xlane.xlu0 %598
      %v600 = vsel %vm387, %v382, 0.0
      %v601 = vadd.f32 %v381, %v600
      %602 = vadd.xlane.f32.xlu0 %v601
      %v603 = vpop.xlane.xlu0 %602
      %v604 = vsel %vm387, %v384, 0.0
      %v605 = vadd.f32 %v383, %v604
      %606 = vadd.xlane.f32.xlu0 %v605
      %v607 = vpop.xlane.xlu0 %606
      %v608 = vsel %vm387, %v386, 0.0
      %v609 = vadd.f32 %v385, %v608
      %610 = vadd.xlane.f32.xlu0 %v609
      %v611 = vpop.xlane.xlu0 %610
      %v612 = vmul.f32 %v391, 0.0051020407
      %v613 = vmul.f32 %v395, 0.0051020407
      %v614 = vmul.f32 %v399, 0.0051020407
      %v615 = vmul.f32 %v403, 0.0051020407
      %v616 = vmul.f32 %v407, 0.0051020407
      %v617 = vmul.f32 %v411, 0.0051020407
      %v618 = vmul.f32 %v415, 0.0051020407
      %v619 = vmul.f32 %v419, 0.0051020407
      %v620 = vmul.f32 %v423, 0.0051020407
      %v621 = vmul.f32 %v427, 0.0051020407
      %v622 = vmul.f32 %v431, 0.0051020407
      %v623 = vmul.f32 %v435, 0.0051020407
      %v624 = vmul.f32 %v439, 0.0051020407
      %v625 = vmul.f32 %v443, 0.0051020407
      %v626 = vmul.f32 %v447, 0.0051020407
      %v627 = vmul.f32 %v451, 0.0051020407
      %v628 = vmul.f32 %v455, 0.0051020407
      %v629 = vmul.f32 %v459, 0.0051020407
      %v630 = vmul.f32 %v463, 0.0051020407
      %v631 = vmul.f32 %v467, 0.0051020407
      %v632 = vmul.f32 %v471, 0.0051020407
      %v633 = vmul.f32 %v475, 0.0051020407
      %v634 = vmul.f32 %v479, 0.0051020407
      %v635 = vmul.f32 %v483, 0.0051020407
      %v636 = vmul.f32 %v487, 0.0051020407
      %v637 = vmul.f32 %v491, 0.0051020407
      %v638 = vmul.f32 %v495, 0.0051020407
      %v639 = vmul.f32 %v499, 0.0051020407
      %v640 = vmul.f32 %v503, 0.0051020407
      %v641 = vmul.f32 %v507, 0.0051020407
      %v642 = vmul.f32 %v511, 0.0051020407
      %v643 = vmul.f32 %v515, 0.0051020407
      %v644 = vmul.f32 %v519, 0.0051020407
      %v645 = vmul.f32 %v523, 0.0051020407
      %v646 = vmul.f32 %v527, 0.0051020407
      %v647 = vmul.f32 %v531, 0.0051020407
      %v648 = vmul.f32 %v535, 0.0051020407
      %v649 = vmul.f32 %v539, 0.0051020407
      %v650 = vmul.f32 %v543, 0.0051020407
      %v651 = vmul.f32 %v547, 0.0051020407
      %v652 = vmul.f32 %v551, 0.0051020407
      %v653 = vmul.f32 %v555, 0.0051020407
      %v654 = vmul.f32 %v559, 0.0051020407
      %v655 = vmul.f32 %v563, 0.0051020407
      %v656 = vmul.f32 %v567, 0.0051020407
      %v657 = vmul.f32 %v571, 0.0051020407
      %v658 = vmul.f32 %v575, 0.0051020407
      %v659 = vmul.f32 %v579, 0.0051020407
      %v660 = vmul.f32 %v583, 0.0051020407
      %v661 = vmul.f32 %v587, 0.0051020407
      %v662 = vmul.f32 %v591, 0.0051020407
      %v663 = vmul.f32 %v595, 0.0051020407
      %v664 = vmul.f32 %v599, 0.0051020407
      %v665 = vmul.f32 %v603, 0.0051020407
      %v666 = vmul.f32 %v607, 0.0051020407
      %v667 = vmul.f32 %v611, 0.0051020407
      %v668 = vsub.f32 %v275, %v612
      %v669 = vsub.f32 %v276, %v612
      %v670 = vsub.f32 %v277, %v613
      %v671 = vsub.f32 %v278, %v613
      %v672 = vsub.f32 %v279, %v614
      %v673 = vsub.f32 %v280, %v614
      %v674 = vsub.f32 %v281, %v615
      %v675 = vsub.f32 %v282, %v615
      %v676 = vsub.f32 %v283, %v616
      %v677 = vsub.f32 %v284, %v616
      %v678 = vsub.f32 %v285, %v617
      %v679 = vsub.f32 %v286, %v617
      %v680 = vsub.f32 %v287, %v618
      %v681 = vsub.f32 %v288, %v618
      %v682 = vsub.f32 %v289, %v619
      %v683 = vsub.f32 %v290, %v619
      %v684 = vsub.f32 %v291, %v620
      %v685 = vsub.f32 %v292, %v620
      %v686 = vsub.f32 %v293, %v621
      %v687 = vsub.f32 %v294, %v621
      %v688 = vsub.f32 %v295, %v622
      %v689 = vsub.f32 %v296, %v622
      %v690 = vsub.f32 %v297, %v623
      %v691 = vsub.f32 %v298, %v623
      %v692 = vsub.f32 %v299, %v624
      %v693 = vsub.f32 %v300, %v624
      %v694 = vsub.f32 %v301, %v625
      %v695 = vsub.f32 %v302, %v625
      %v696 = vsub.f32 %v303, %v626
      %v697 = vsub.f32 %v304, %v626
      %v698 = vsub.f32 %v305, %v627
      %v699 = vsub.f32 %v306, %v627
      %v700 = vsub.f32 %v307, %v628
      %v701 = vsub.f32 %v308, %v628
      %v702 = vsub.f32 %v309, %v629
      %v703 = vsub.f32 %v310, %v629
      %v704 = vsub.f32 %v311, %v630
      %v705 = vsub.f32 %v312, %v630
      %v706 = vsub.f32 %v313, %v631
      %v707 = vsub.f32 %v314, %v631
      %v708 = vsub.f32 %v315, %v632
      %v709 = vsub.f32 %v316, %v632
      %v710 = vsub.f32 %v317, %v633
      %v711 = vsub.f32 %v318, %v633
      %v712 = vsub.f32 %v319, %v634
      %v713 = vsub.f32 %v320, %v634
      %v714 = vsub.f32 %v321, %v635
      %v715 = vsub.f32 %v322, %v635
      %v716 = vsub.f32 %v323, %v636
      %v717 = vsub.f32 %v324, %v636
      %v718 = vsub.f32 %v325, %v637
      %v719 = vsub.f32 %v326, %v637
      %v720 = vsub.f32 %v327, %v638
      %v721 = vsub.f32 %v328, %v638
      %v722 = vsub.f32 %v329, %v639
      %v723 = vsub.f32 %v330, %v639
      %v724 = vsub.f32 %v331, %v640
      %v725 = vsub.f32 %v332, %v640
      %v726 = vsub.f32 %v333, %v641
      %v727 = vsub.f32 %v334, %v641
      %v728 = vsub.f32 %v335, %v642
      %v729 = vsub.f32 %v336, %v642
      %v730 = vsub.f32 %v337, %v643
      %v731 = vsub.f32 %v338, %v643
      %v732 = vsub.f32 %v339, %v644
      %v733 = vsub.f32 %v340, %v644
      %v734 = vsub.f32 %v341, %v645
      %v735 = vsub.f32 %v342, %v645
      %v736 = vsub.f32 %v343, %v646
      %v737 = vsub.f32 %v344, %v646
      %v738 = vsub.f32 %v345, %v647
      %v739 = vsub.f32 %v346, %v647
      %v740 = vsub.f32 %v347, %v648
      %v741 = vsub.f32 %v348, %v648
      %v742 = vsub.f32 %v349, %v649
      %v743 = vsub.f32 %v350, %v649
      %v744 = vsub.f32 %v351, %v650
      %v745 = vsub.f32 %v352, %v650
      %v746 = vsub.f32 %v353, %v651
      %v747 = vsub.f32 %v354, %v651
      %v748 = vsub.f32 %v355, %v652
      %v749 = vsub.f32 %v356, %v652
      %v750 = vsub.f32 %v357, %v653
      %v751 = vsub.f32 %v358, %v653
      %v752 = vsub.f32 %v359, %v654
      %v753 = vsub.f32 %v360, %v654
      %v754 = vsub.f32 %v361, %v655
      %v755 = vsub.f32 %v362, %v655
      %v756 = vsub.f32 %v363, %v656
      %v757 = vsub.f32 %v364, %v656
      %v758 = vsub.f32 %v365, %v657
      %v759 = vsub.f32 %v366, %v657
      %v760 = vsub.f32 %v367, %v658
      %v761 = vsub.f32 %v368, %v658
      %v762 = vsub.f32 %v369, %v659
      %v763 = vsub.f32 %v370, %v659
      %v764 = vsub.f32 %v371, %v660
      %v765 = vsub.f32 %v372, %v660
      %v766 = vsub.f32 %v373, %v661
      %v767 = vsub.f32 %v374, %v661
      %v768 = vsub.f32 %v375, %v662
      %v769 = vsub.f32 %v376, %v662
      %v770 = vsub.f32 %v377, %v663
      %v771 = vsub.f32 %v378, %v663
      %v772 = vsub.f32 %v379, %v664
      %v773 = vsub.f32 %v380, %v664
      %v774 = vsub.f32 %v381, %v665
      %v775 = vsub.f32 %v382, %v665
      %v776 = vsub.f32 %v383, %v666
      %v777 = vsub.f32 %v384, %v666
      %v778 = vsub.f32 %v385, %v667
      %v779 = vsub.f32 %v386, %v667
      %v780 = vmul.f32 %v668, %v668
      %v781 = vmul.f32 %v669, %v669
      %v782 = vmul.f32 %v670, %v670
      %v783 = vmul.f32 %v671, %v671
      %v784 = vmul.f32 %v672, %v672
      %v785 = vmul.f32 %v673, %v673
      %v786 = vmul.f32 %v674, %v674
      %v787 = vmul.f32 %v675, %v675
      %v788 = vmul.f32 %v676, %v676
      %v789 = vmul.f32 %v677, %v677
      %v790 = vmul.f32 %v678, %v678
      %v791 = vmul.f32 %v679, %v679
      %v792 = vmul.f32 %v680, %v680
      %v793 = vmul.f32 %v681, %v681
      %v794 = vmul.f32 %v682, %v682
      %v795 = vmul.f32 %v683, %v683
      %v796 = vmul.f32 %v684, %v684
      %v797 = vmul.f32 %v685, %v685
      %v798 = vmul.f32 %v686, %v686
      %v799 = vmul.f32 %v687, %v687
      %v800 = vmul.f32 %v688, %v688
      %v801 = vmul.f32 %v689, %v689
      %v802 = vmul.f32 %v690, %v690
      %v803 = vmul.f32 %v691, %v691
      %v804 = vmul.f32 %v692, %v692
      %v805 = vmul.f32 %v693, %v693
      %v806 = vmul.f32 %v694, %v694
      %v807 = vmul.f32 %v695, %v695
      %v808 = vmul.f32 %v696, %v696
      %v809 = vmul.f32 %v697, %v697
      %v810 = vmul.f32 %v698, %v698
      %v811 = vmul.f32 %v699, %v699
      %v812 = vmul.f32 %v700, %v700
      %v813 = vmul.f32 %v701, %v701
      %v814 = vmul.f32 %v702, %v702
      %v815 = vmul.f32 %v703, %v703
      %v816 = vmul.f32 %v704, %v704
      %v817 = vmul.f32 %v705, %v705
      %v818 = vmul.f32 %v706, %v706
      %v819 = vmul.f32 %v707, %v707
      %v820 = vmul.f32 %v708, %v708
      %v821 = vmul.f32 %v709, %v709
      %v822 = vmul.f32 %v710, %v710
      %v823 = vmul.f32 %v711, %v711
      %v824 = vmul.f32 %v712, %v712
      %v825 = vmul.f32 %v713, %v713
      %v826 = vmul.f32 %v714, %v714
      %v827 = vmul.f32 %v715, %v715
      %v828 = vmul.f32 %v716, %v716
      %v829 = vmul.f32 %v717, %v717
      %v830 = vmul.f32 %v718, %v718
      %v831 = vmul.f32 %v719, %v719
      %v832 = vmul.f32 %v720, %v720
      %v833 = vmul.f32 %v721, %v721
      %v834 = vmul.f32 %v722, %v722
      %v835 = vmul.f32 %v723, %v723
      %v836 = vmul.f32 %v724, %v724
      %v837 = vmul.f32 %v725, %v725
      %v838 = vmul.f32 %v726, %v726
      %v839 = vmul.f32 %v727, %v727
      %v840 = vmul.f32 %v728, %v728
      %v841 = vmul.f32 %v729, %v729
      %v842 = vmul.f32 %v730, %v730
      %v843 = vmul.f32 %v731, %v731
      %v844 = vmul.f32 %v732, %v732
      %v845 = vmul.f32 %v733, %v733
      %v846 = vmul.f32 %v734, %v734
      %v847 = vmul.f32 %v735, %v735
      %v848 = vmul.f32 %v736, %v736
      %v849 = vmul.f32 %v737, %v737
      %v850 = vmul.f32 %v738, %v738
      %v851 = vmul.f32 %v739, %v739
      %v852 = vmul.f32 %v740, %v740
      %v853 = vmul.f32 %v741, %v741
      %v854 = vmul.f32 %v742, %v742
      %v855 = vmul.f32 %v743, %v743
      %v856 = vmul.f32 %v744, %v744
      %v857 = vmul.f32 %v745, %v745
      %v858 = vmul.f32 %v746, %v746
      %v859 = vmul.f32 %v747, %v747
      %v860 = vmul.f32 %v748, %v748
      %v861 = vmul.f32 %v749, %v749
      %v862 = vmul.f32 %v750, %v750
      %v863 = vmul.f32 %v751, %v751
      %v864 = vmul.f32 %v752, %v752
      %v865 = vmul.f32 %v753, %v753
      %v866 = vmul.f32 %v754, %v754
      %v867 = vmul.f32 %v755, %v755
      %v868 = vmul.f32 %v756, %v756
      %v869 = vmul.f32 %v757, %v757
      %v870 = vmul.f32 %v758, %v758
      %v871 = vmul.f32 %v759, %v759
      %v872 = vmul.f32 %v760, %v760
      %v873 = vmul.f32 %v761, %v761
      %v874 = vmul.f32 %v762, %v762
      %v875 = vmul.f32 %v763, %v763
      %v876 = vmul.f32 %v764, %v764
      %v877 = vmul.f32 %v765, %v765
      %v878 = vmul.f32 %v766, %v766
      %v879 = vmul.f32 %v767, %v767
      %v880 = vmul.f32 %v768, %v768
      %v881 = vmul.f32 %v769, %v769
      %v882 = vmul.f32 %v770, %v770
      %v883 = vmul.f32 %v771, %v771
      %v884 = vmul.f32 %v772, %v772
      %v885 = vmul.f32 %v773, %v773
      %v886 = vmul.f32 %v774, %v774
      %v887 = vmul.f32 %v775, %v775
      %v888 = vmul.f32 %v776, %v776
      %v889 = vmul.f32 %v777, %v777
      %v890 = vmul.f32 %v778, %v778
      %v891 = vmul.f32 %v779, %v779
      %v892 = vsel %vm387, %v781, 0.0
      %v893 = vadd.f32 %v780, %v892
      %894 = vadd.xlane.f32.xlu0 %v893
      %v895 = vpop.xlane.xlu0 %894
      %v896 = vsel %vm387, %v783, 0.0
      %v897 = vadd.f32 %v782, %v896
      %898 = vadd.xlane.f32.xlu0 %v897
      %v899 = vpop.xlane.xlu0 %898
      %v900 = vsel %vm387, %v785, 0.0
      %v901 = vadd.f32 %v784, %v900
      %902 = vadd.xlane.f32.xlu0 %v901
      %v903 = vpop.xlane.xlu0 %902
      %v904 = vsel %vm387, %v787, 0.0
      %v905 = vadd.f32 %v786, %v904
      %906 = vadd.xlane.f32.xlu0 %v905
      %v907 = vpop.xlane.xlu0 %906
      %v908 = vsel %vm387, %v789, 0.0
      %v909 = vadd.f32 %v788, %v908
      %910 = vadd.xlane.f32.xlu0 %v909
      %v911 = vpop.xlane.xlu0 %910
      %v912 = vsel %vm387, %v791, 0.0
      %v913 = vadd.f32 %v790, %v912
      %914 = vadd.xlane.f32.xlu0 %v913
      %v915 = vpop.xlane.xlu0 %914
      %v916 = vsel %vm387, %v793, 0.0
      %v917 = vadd.f32 %v792, %v916
      %918 = vadd.xlane.f32.xlu0 %v917
      %v919 = vpop.xlane.xlu0 %918
      %v920 = vsel %vm387, %v795, 0.0
      %v921 = vadd.f32 %v794, %v920
      %922 = vadd.xlane.f32.xlu0 %v921
      %v923 = vpop.xlane.xlu0 %922
      %v924 = vsel %vm387, %v797, 0.0
      %v925 = vadd.f32 %v796, %v924
      %926 = vadd.xlane.f32.xlu0 %v925
      %v927 = vpop.xlane.xlu0 %926
      %v928 = vsel %vm387, %v799, 0.0
      %v929 = vadd.f32 %v798, %v928
      %930 = vadd.xlane.f32.xlu0 %v929
      %v931 = vpop.xlane.xlu0 %930
      %v932 = vsel %vm387, %v801, 0.0
      %v933 = vadd.f32 %v800, %v932
      %934 = vadd.xlane.f32.xlu0 %v933
      %v935 = vpop.xlane.xlu0 %934
      %v936 = vsel %vm387, %v803, 0.0
      %v937 = vadd.f32 %v802, %v936
      %938 = vadd.xlane.f32.xlu0 %v937
      %v939 = vpop.xlane.xlu0 %938
      %v940 = vsel %vm387, %v805, 0.0
      %v941 = vadd.f32 %v804, %v940
      %942 = vadd.xlane.f32.xlu0 %v941
      %v943 = vpop.xlane.xlu0 %942
      %v944 = vsel %vm387, %v807, 0.0
      %v945 = vadd.f32 %v806, %v944
      %946 = vadd.xlane.f32.xlu0 %v945
      %v947 = vpop.xlane.xlu0 %946
      %v948 = vsel %vm387, %v809, 0.0
      %v949 = vadd.f32 %v808, %v948
      %950 = vadd.xlane.f32.xlu0 %v949
      %v951 = vpop.xlane.xlu0 %950
      %v952 = vsel %vm387, %v811, 0.0
      %v953 = vadd.f32 %v810, %v952
      %954 = vadd.xlane.f32.xlu0 %v953
      %v955 = vpop.xlane.xlu0 %954
      %v956 = vsel %vm387, %v813, 0.0
      %v957 = vadd.f32 %v812, %v956
      %958 = vadd.xlane.f32.xlu0 %v957
      %v959 = vpop.xlane.xlu0 %958
      %v960 = vsel %vm387, %v815, 0.0
      %v961 = vadd.f32 %v814, %v960
      %962 = vadd.xlane.f32.xlu0 %v961
      %v963 = vpop.xlane.xlu0 %962
      %v964 = vsel %vm387, %v817, 0.0
      %v965 = vadd.f32 %v816, %v964
      %966 = vadd.xlane.f32.xlu0 %v965
      %v967 = vpop.xlane.xlu0 %966
      %v968 = vsel %vm387, %v819, 0.0
      %v969 = vadd.f32 %v818, %v968
      %970 = vadd.xlane.f32.xlu0 %v969
      %v971 = vpop.xlane.xlu0 %970
      %v972 = vsel %vm387, %v821, 0.0
      %v973 = vadd.f32 %v820, %v972
      %974 = vadd.xlane.f32.xlu0 %v973
      %v975 = vpop.xlane.xlu0 %974
      %v976 = vsel %vm387, %v823, 0.0
      %v977 = vadd.f32 %v822, %v976
      %978 = vadd.xlane.f32.xlu0 %v977
      %v979 = vpop.xlane.xlu0 %978
      %v980 = vsel %vm387, %v825, 0.0
      %v981 = vadd.f32 %v824, %v980
      %982 = vadd.xlane.f32.xlu0 %v981
      %v983 = vpop.xlane.xlu0 %982
      %v984 = vsel %vm387, %v827, 0.0
      %v985 = vadd.f32 %v826, %v984
      %986 = vadd.xlane.f32.xlu0 %v985
      %v987 = vpop.xlane.xlu0 %986
      %v988 = vsel %vm387, %v829, 0.0
      %v989 = vadd.f32 %v828, %v988
      %990 = vadd.xlane.f32.xlu0 %v989
      %v991 = vpop.xlane.xlu0 %990
      %v992 = vsel %vm387, %v831, 0.0
      %v993 = vadd.f32 %v830, %v992
      %994 = vadd.xlane.f32.xlu0 %v993
      %v995 = vpop.xlane.xlu0 %994
      %v996 = vsel %vm387, %v833, 0.0
      %v997 = vadd.f32 %v832, %v996
      %998 = vadd.xlane.f32.xlu0 %v997
      %v999 = vpop.xlane.xlu0 %998
      %v1000 = vsel %vm387, %v835, 0.0
      %v1001 = vadd.f32 %v834, %v1000
      %1002 = vadd.xlane.f32.xlu0 %v1001
      %v1003 = vpop.xlane.xlu0 %1002
      %v1004 = vsel %vm387, %v837, 0.0
      %v1005 = vadd.f32 %v836, %v1004
      %1006 = vadd.xlane.f32.xlu0 %v1005
      %v1007 = vpop.xlane.xlu0 %1006
      %v1008 = vsel %vm387, %v839, 0.0
      %v1009 = vadd.f32 %v838, %v1008
      %1010 = vadd.xlane.f32.xlu0 %v1009
      %v1011 = vpop.xlane.xlu0 %1010
      %v1012 = vsel %vm387, %v841, 0.0
      %v1013 = vadd.f32 %v840, %v1012
      %1014 = vadd.xlane.f32.xlu0 %v1013
      %v1015 = vpop.xlane.xlu0 %1014
      %v1016 = vsel %vm387, %v843, 0.0
      %v1017 = vadd.f32 %v842, %v1016
      %1018 = vadd.xlane.f32.xlu0 %v1017
      %v1019 = vpop.xlane.xlu0 %1018
      %v1020 = vsel %vm387, %v845, 0.0
      %v1021 = vadd.f32 %v844, %v1020
      %1022 = vadd.xlane.f32.xlu0 %v1021
      %v1023 = vpop.xlane.xlu0 %1022
      %v1024 = vsel %vm387, %v847, 0.0
      %v1025 = vadd.f32 %v846, %v1024
      %1026 = vadd.xlane.f32.xlu0 %v1025
      %v1027 = vpop.xlane.xlu0 %1026
      %v1028 = vsel %vm387, %v849, 0.0
      %v1029 = vadd.f32 %v848, %v1028
      %1030 = vadd.xlane.f32.xlu0 %v1029
      %v1031 = vpop.xlane.xlu0 %1030
      %v1032 = vsel %vm387, %v851, 0.0
      %v1033 = vadd.f32 %v850, %v1032
      %1034 = vadd.xlane.f32.xlu0 %v1033
      %v1035 = vpop.xlane.xlu0 %1034
      %v1036 = vsel %vm387, %v853, 0.0
      %v1037 = vadd.f32 %v852, %v1036
      %1038 = vadd.xlane.f32.xlu0 %v1037
      %v1039 = vpop.xlane.xlu0 %1038
      %v1040 = vsel %vm387, %v855, 0.0
      %v1041 = vadd.f32 %v854, %v1040
      %1042 = vadd.xlane.f32.xlu0 %v1041
      %v1043 = vpop.xlane.xlu0 %1042
      %v1044 = vsel %vm387, %v857, 0.0
      %v1045 = vadd.f32 %v856, %v1044
      %1046 = vadd.xlane.f32.xlu0 %v1045
      %v1047 = vpop.xlane.xlu0 %1046
      %v1048 = vsel %vm387, %v859, 0.0
      %v1049 = vadd.f32 %v858, %v1048
      %1050 = vadd.xlane.f32.xlu0 %v1049
      %v1051 = vpop.xlane.xlu0 %1050
      %v1052 = vsel %vm387, %v861, 0.0
      %v1053 = vadd.f32 %v860, %v1052
      %1054 = vadd.xlane.f32.xlu0 %v1053
      %v1055 = vpop.xlane.xlu0 %1054
      %v1056 = vsel %vm387, %v863, 0.0
      %v1057 = vadd.f32 %v862, %v1056
      %1058 = vadd.xlane.f32.xlu0 %v1057
      %v1059 = vpop.xlane.xlu0 %1058
      %v1060 = vsel %vm387, %v865, 0.0
      %v1061 = vadd.f32 %v864, %v1060
      %1062 = vadd.xlane.f32.xlu0 %v1061
      %v1063 = vpop.xlane.xlu0 %1062
      %v1064 = vsel %vm387, %v867, 0.0
      %v1065 = vadd.f32 %v866, %v1064
      %1066 = vadd.xlane.f32.xlu0 %v1065
      %v1067 = vpop.xlane.xlu0 %1066
      %v1068 = vsel %vm387, %v869, 0.0
      %v1069 = vadd.f32 %v868, %v1068
      %1070 = vadd.xlane.f32.xlu0 %v1069
      %v1071 = vpop.xlane.xlu0 %1070
      %v1072 = vsel %vm387, %v871, 0.0
      %v1073 = vadd.f32 %v870, %v1072
      %1074 = vadd.xlane.f32.xlu0 %v1073
      %v1075 = vpop.xlane.xlu0 %1074
      %v1076 = vsel %vm387, %v873, 0.0
      %v1077 = vadd.f32 %v872, %v1076
      %1078 = vadd.xlane.f32.xlu0 %v1077
      %v1079 = vpop.xlane.xlu0 %1078
      %v1080 = vsel %vm387, %v875, 0.0
      %v1081 = vadd.f32 %v874, %v1080
      %1082 = vadd.xlane.f32.xlu0 %v1081
      %v1083 = vpop.xlane.xlu0 %1082
      %v1084 = vsel %vm387, %v877, 0.0
      %v1085 = vadd.f32 %v876, %v1084
      %1086 = vadd.xlane.f32.xlu0 %v1085
      %v1087 = vpop.xlane.xlu0 %1086
      %v1088 = vsel %vm387, %v879, 0.0
      %v1089 = vadd.f32 %v878, %v1088
      %1090 = vadd.xlane.f32.xlu0 %v1089
      %v1091 = vpop.xlane.xlu0 %1090
      %v1092 = vsel %vm387, %v881, 0.0
      %v1093 = vadd.f32 %v880, %v1092
      %1094 = vadd.xlane.f32.xlu0 %v1093
      %v1095 = vpop.xlane.xlu0 %1094
      %v1096 = vsel %vm387, %v883, 0.0
      %v1097 = vadd.f32 %v882, %v1096
      %1098 = vadd.xlane.f32.xlu0 %v1097
      %v1099 = vpop.xlane.xlu0 %1098
      %v1100 = vsel %vm387, %v885, 0.0
      %v1101 = vadd.f32 %v884, %v1100
      %1102 = vadd.xlane.f32.xlu0 %v1101
      %v1103 = vpop.xlane.xlu0 %1102
      %v1104 = vsel %vm387, %v887, 0.0
      %v1105 = vadd.f32 %v886, %v1104
      %1106 = vadd.xlane.f32.xlu0 %v1105
      %v1107 = vpop.xlane.xlu0 %1106
      %v1108 = vsel %vm387, %v889, 0.0
      %v1109 = vadd.f32 %v888, %v1108
      %1110 = vadd.xlane.f32.xlu0 %v1109
      %v1111 = vpop.xlane.xlu0 %1110
      %v1112 = vsel %vm387, %v891, 0.0
      %v1113 = vadd.f32 %v890, %v1112
      %1114 = vadd.xlane.f32.xlu0 %v1113
      %v1115 = vpop.xlane.xlu0 %1114
      %v1116 = vmul.f32 %v895, 0.0051020407
      %v1117 = vmul.f32 %v899, 0.0051020407
      %v1118 = vmul.f32 %v903, 0.0051020407
      %v1119 = vmul.f32 %v907, 0.0051020407
      %v1120 = vmul.f32 %v911, 0.0051020407
      %v1121 = vmul.f32 %v915, 0.0051020407
      %v1122 = vmul.f32 %v919, 0.0051020407
      %v1123 = vmul.f32 %v923, 0.0051020407
      %v1124 = vmul.f32 %v927, 0.0051020407
      %v1125 = vmul.f32 %v931, 0.0051020407
      %v1126 = vmul.f32 %v935, 0.0051020407
      %v1127 = vmul.f32 %v939, 0.0051020407
      %v1128 = vmul.f32 %v943, 0.0051020407
      %v1129 = vmul.f32 %v947, 0.0051020407
      %v1130 = vmul.f32 %v951, 0.0051020407
      %v1131 = vmul.f32 %v955, 0.0051020407
      %v1132 = vmul.f32 %v959, 0.0051020407
      %v1133 = vmul.f32 %v963, 0.0051020407
      %v1134 = vmul.f32 %v967, 0.0051020407
      %v1135 = vmul.f32 %v971, 0.0051020407
      %v1136 = vmul.f32 %v975, 0.0051020407
      %v1137 = vmul.f32 %v979, 0.0051020407
      %v1138 = vmul.f32 %v983, 0.0051020407
      %v1139 = vmul.f32 %v987, 0.0051020407
      %v1140 = vmul.f32 %v991, 0.0051020407
      %v1141 = vmul.f32 %v995, 0.0051020407
      %v1142 = vmul.f32 %v999, 0.0051020407
      %v1143 = vmul.f32 %v1003, 0.0051020407
      %v1144 = vmul.f32 %v1007, 0.0051020407
      %v1145 = vmul.f32 %v1011, 0.0051020407
      %v1146 = vmul.f32 %v1015, 0.0051020407
      %v1147 = vmul.f32 %v1019, 0.0051020407
      %v1148 = vmul.f32 %v1023, 0.0051020407
      %v1149 = vmul.f32 %v1027, 0.0051020407
      %v1150 = vmul.f32 %v1031, 0.0051020407
      %v1151 = vmul.f32 %v1035, 0.0051020407
      %v1152 = vmul.f32 %v1039, 0.0051020407
      %v1153 = vmul.f32 %v1043, 0.0051020407
      %v1154 = vmul.f32 %v1047, 0.0051020407
      %v1155 = vmul.f32 %v1051, 0.0051020407
      %v1156 = vmul.f32 %v1055, 0.0051020407
      %v1157 = vmul.f32 %v1059, 0.0051020407
      %v1158 = vmul.f32 %v1063, 0.0051020407
      %v1159 = vmul.f32 %v1067, 0.0051020407
      %v1160 = vmul.f32 %v1071, 0.0051020407
      %v1161 = vmul.f32 %v1075, 0.0051020407
      %v1162 = vmul.f32 %v1079, 0.0051020407
      %v1163 = vmul.f32 %v1083, 0.0051020407
      %v1164 = vmul.f32 %v1087, 0.0051020407
      %v1165 = vmul.f32 %v1091, 0.0051020407
      %v1166 = vmul.f32 %v1095, 0.0051020407
      %v1167 = vmul.f32 %v1099, 0.0051020407
      %v1168 = vmul.f32 %v1103, 0.0051020407
      %v1169 = vmul.f32 %v1107, 0.0051020407
      %v1170 = vmul.f32 %v1111, 0.0051020407
      %v1171 = vmul.f32 %v1115, 0.0051020407
      %v1172 = vmax.f32 %v1116, 0.0
      %v1173 = vmax.f32 %v1117, 0.0
      %v1174 = vmax.f32 %v1118, 0.0
      %v1175 = vmax.f32 %v1119, 0.0
      %v1176 = vmax.f32 %v1120, 0.0
      %v1177 = vmax.f32 %v1121, 0.0
      %v1178 = vmax.f32 %v1122, 0.0
      %v1179 = vmax.f32 %v1123, 0.0
      %v1180 = vmax.f32 %v1124, 0.0
      %v1181 = vmax.f32 %v1125, 0.0
      %v1182 = vmax.f32 %v1126, 0.0
      %v1183 = vmax.f32 %v1127, 0.0
      %v1184 = vmax.f32 %v1128, 0.0
      %v1185 = vmax.f32 %v1129, 0.0
      %v1186 = vmax.f32 %v1130, 0.0
      %v1187 = vmax.f32 %v1131, 0.0
      %v1188 = vmax.f32 %v1132, 0.0
      %v1189 = vmax.f32 %v1133, 0.0
      %v1190 = vmax.f32 %v1134, 0.0
      %v1191 = vmax.f32 %v1135, 0.0
      %v1192 = vmax.f32 %v1136, 0.0
      %v1193 = vmax.f32 %v1137, 0.0
      %v1194 = vmax.f32 %v1138, 0.0
      %v1195 = vmax.f32 %v1139, 0.0
      %v1196 = vmax.f32 %v1140, 0.0
      %v1197 = vmax.f32 %v1141, 0.0
      %v1198 = vmax.f32 %v1142, 0.0
      %v1199 = vmax.f32 %v1143, 0.0
      %v1200 = vmax.f32 %v1144, 0.0
      %v1201 = vmax.f32 %v1145, 0.0
      %v1202 = vmax.f32 %v1146, 0.0
      %v1203 = vmax.f32 %v1147, 0.0
      %v1204 = vmax.f32 %v1148, 0.0
      %v1205 = vmax.f32 %v1149, 0.0
      %v1206 = vmax.f32 %v1150, 0.0
      %v1207 = vmax.f32 %v1151, 0.0
      %v1208 = vmax.f32 %v1152, 0.0
      %v1209 = vmax.f32 %v1153, 0.0
      %v1210 = vmax.f32 %v1154, 0.0
      %v1211 = vmax.f32 %v1155, 0.0
      %v1212 = vmax.f32 %v1156, 0.0
      %v1213 = vmax.f32 %v1157, 0.0
      %v1214 = vmax.f32 %v1158, 0.0
      %v1215 = vmax.f32 %v1159, 0.0
      %v1216 = vmax.f32 %v1160, 0.0
      %v1217 = vmax.f32 %v1161, 0.0
      %v1218 = vmax.f32 %v1162, 0.0
      %v1219 = vmax.f32 %v1163, 0.0
      %v1220 = vmax.f32 %v1164, 0.0
      %v1221 = vmax.f32 %v1165, 0.0
      %v1222 = vmax.f32 %v1166, 0.0
      %v1223 = vmax.f32 %v1167, 0.0
      %v1224 = vmax.f32 %v1168, 0.0
      %v1225 = vmax.f32 %v1169, 0.0
      %v1226 = vmax.f32 %v1170, 0.0
      %v1227 = vmax.f32 %v1171, 0.0
      %v1228 = vadd.f32 %v1172, 1e-05
      %v1229 = vadd.f32 %v1173, 1e-05
      %v1230 = vadd.f32 %v1174, 1e-05
      %v1231 = vadd.f32 %v1175, 1e-05
      %v1232 = vadd.f32 %v1176, 1e-05
      %v1233 = vadd.f32 %v1177, 1e-05
      %v1234 = vadd.f32 %v1178, 1e-05
      %v1235 = vadd.f32 %v1179, 1e-05
      %v1236 = vadd.f32 %v1180, 1e-05
      %v1237 = vadd.f32 %v1181, 1e-05
      %v1238 = vadd.f32 %v1182, 1e-05
      %v1239 = vadd.f32 %v1183, 1e-05
      %v1240 = vadd.f32 %v1184, 1e-05
      %v1241 = vadd.f32 %v1185, 1e-05
      %v1242 = vadd.f32 %v1186, 1e-05
      %v1243 = vadd.f32 %v1187, 1e-05
      %v1244 = vadd.f32 %v1188, 1e-05
      %v1245 = vadd.f32 %v1189, 1e-05
      %v1246 = vadd.f32 %v1190, 1e-05
      %v1247 = vadd.f32 %v1191, 1e-05
      %v1248 = vadd.f32 %v1192, 1e-05
      %v1249 = vadd.f32 %v1193, 1e-05
      %v1250 = vadd.f32 %v1194, 1e-05
      %v1251 = vadd.f32 %v1195, 1e-05
      %v1252 = vadd.f32 %v1196, 1e-05
      %v1253 = vadd.f32 %v1197, 1e-05
      %v1254 = vadd.f32 %v1198, 1e-05
      %v1255 = vadd.f32 %v1199, 1e-05
      %v1256 = vadd.f32 %v1200, 1e-05
      %v1257 = vadd.f32 %v1201, 1e-05
      %v1258 = vadd.f32 %v1202, 1e-05
      %v1259 = vadd.f32 %v1203, 1e-05
      %v1260 = vadd.f32 %v1204, 1e-05
      %v1261 = vadd.f32 %v1205, 1e-05
      %v1262 = vadd.f32 %v1206, 1e-05
      %v1263 = vadd.f32 %v1207, 1e-05
      %v1264 = vadd.f32 %v1208, 1e-05
      %v1265 = vadd.f32 %v1209, 1e-05
      %v1266 = vadd.f32 %v1210, 1e-05
      %v1267 = vadd.f32 %v1211, 1e-05
      %v1268 = vadd.f32 %v1212, 1e-05
      %v1269 = vadd.f32 %v1213, 1e-05
      %v1270 = vadd.f32 %v1214, 1e-05
      %v1271 = vadd.f32 %v1215, 1e-05
      %v1272 = vadd.f32 %v1216, 1e-05
      %v1273 = vadd.f32 %v1217, 1e-05
      %v1274 = vadd.f32 %v1218, 1e-05
      %v1275 = vadd.f32 %v1219, 1e-05
      %v1276 = vadd.f32 %v1220, 1e-05
      %v1277 = vadd.f32 %v1221, 1e-05
      %v1278 = vadd.f32 %v1222, 1e-05
      %v1279 = vadd.f32 %v1223, 1e-05
      %v1280 = vadd.f32 %v1224, 1e-05
      %v1281 = vadd.f32 %v1225, 1e-05
      %v1282 = vadd.f32 %v1226, 1e-05
      %v1283 = vadd.f32 %v1227, 1e-05
      %v1284 = vrsqrt.pop %v1228
      %v1285 = vmul.f32 %v1284, %v1228
      %v1286 = vmul.f32 %v1285, %v1284
      %v1287 = vmul.f32 0.5, %v1286
      %v1288 = vsub.f32 1.5, %v1287
      %v1289 = vmul.f32 %v1284, %v1288
      %vm1290 = vweird.f32 %v1228
      %vm1291 = vweird.f32 %v1284
      %vm1292 = vmor %vm1290, %vm1291
      %v1293 = vsel %vm1292, %v1284, %v1289
      %v1294 = vrsqrt.pop %v1229
      %v1295 = vmul.f32 %v1294, %v1229
      %v1296 = vmul.f32 %v1295, %v1294
      %v1297 = vmul.f32 0.5, %v1296
      %v1298 = vsub.f32 1.5, %v1297
      %v1299 = vmul.f32 %v1294, %v1298
      %vm1300 = vweird.f32 %v1229
      %vm1301 = vweird.f32 %v1294
      %vm1302 = vmor %vm1300, %vm1301
      %v1303 = vsel %vm1302, %v1294, %v1299
      %v1304 = vrsqrt.pop %v1230
      %v1305 = vmul.f32 %v1304, %v1230
      %v1306 = vmul.f32 %v1305, %v1304
      %v1307 = vmul.f32 0.5, %v1306
      %v1308 = vsub.f32 1.5, %v1307
      %v1309 = vmul.f32 %v1304, %v1308
      %vm1310 = vweird.f32 %v1230
      %vm1311 = vweird.f32 %v1304
      %vm1312 = vmor %vm1310, %vm1311
      %v1313 = vsel %vm1312, %v1304, %v1309
      %v1314 = vrsqrt.pop %v1231
      %v1315 = vmul.f32 %v1314, %v1231
      %v1316 = vmul.f32 %v1315, %v1314
      %v1317 = vmul.f32 0.5, %v1316
      %v1318 = vsub.f32 1.5, %v1317
      %v1319 = vmul.f32 %v1314, %v1318
      %vm1320 = vweird.f32 %v1231
      %vm1321 = vweird.f32 %v1314
      %vm1322 = vmor %vm1320, %vm1321
      %v1323 = vsel %vm1322, %v1314, %v1319
      %v1324 = vrsqrt.pop %v1232
      %v1325 = vmul.f32 %v1324, %v1232
      %v1326 = vmul.f32 %v1325, %v1324
      %v1327 = vmul.f32 0.5, %v1326
      %v1328 = vsub.f32 1.5, %v1327
      %v1329 = vmul.f32 %v1324, %v1328
      %vm1330 = vweird.f32 %v1232
      %vm1331 = vweird.f32 %v1324
      %vm1332 = vmor %vm1330, %vm1331
      %v1333 = vsel %vm1332, %v1324, %v1329
      %v1334 = vrsqrt.pop %v1233
      %v1335 = vmul.f32 %v1334, %v1233
      %v1336 = vmul.f32 %v1335, %v1334
      %v1337 = vmul.f32 0.5, %v1336
      %v1338 = vsub.f32 1.5, %v1337
      %v1339 = vmul.f32 %v1334, %v1338
      %vm1340 = vweird.f32 %v1233
      %vm1341 = vweird.f32 %v1334
      %vm1342 = vmor %vm1340, %vm1341
      %v1343 = vsel %vm1342, %v1334, %v1339
      %v1344 = vrsqrt.pop %v1234
      %v1345 = vmul.f32 %v1344, %v1234
      %v1346 = vmul.f32 %v1345, %v1344
      %v1347 = vmul.f32 0.5, %v1346
      %v1348 = vsub.f32 1.5, %v1347
      %v1349 = vmul.f32 %v1344, %v1348
      %vm1350 = vweird.f32 %v1234
      %vm1351 = vweird.f32 %v1344
      %vm1352 = vmor %vm1350, %vm1351
      %v1353 = vsel %vm1352, %v1344, %v1349
      %v1354 = vrsqrt.pop %v1235
      %v1355 = vmul.f32 %v1354, %v1235
      %v1356 = vmul.f32 %v1355, %v1354
      %v1357 = vmul.f32 0.5, %v1356
      %v1358 = vsub.f32 1.5, %v1357
      %v1359 = vmul.f32 %v1354, %v1358
      %vm1360 = vweird.f32 %v1235
      %vm1361 = vweird.f32 %v1354
      %vm1362 = vmor %vm1360, %vm1361
      %v1363 = vsel %vm1362, %v1354, %v1359
      %v1364 = vrsqrt.pop %v1236
      %v1365 = vmul.f32 %v1364, %v1236
      %v1366 = vmul.f32 %v1365, %v1364
      %v1367 = vmul.f32 0.5, %v1366
      %v1368 = vsub.f32 1.5, %v1367
      %v1369 = vmul.f32 %v1364, %v1368
      %vm1370 = vweird.f32 %v1236
      %vm1371 = vweird.f32 %v1364
      %vm1372 = vmor %vm1370, %vm1371
      %v1373 = vsel %vm1372, %v1364, %v1369
      %v1374 = vrsqrt.pop %v1237
      %v1375 = vmul.f32 %v1374, %v1237
      %v1376 = vmul.f32 %v1375, %v1374
      %v1377 = vmul.f32 0.5, %v1376
      %v1378 = vsub.f32 1.5, %v1377
      %v1379 = vmul.f32 %v1374, %v1378
      %vm1380 = vweird.f32 %v1237
      %vm1381 = vweird.f32 %v1374
      %vm1382 = vmor %vm1380, %vm1381
      %v1383 = vsel %vm1382, %v1374, %v1379
      %v1384 = vrsqrt.pop %v1238
      %v1385 = vmul.f32 %v1384, %v1238
      %v1386 = vmul.f32 %v1385, %v1384
      %v1387 = vmul.f32 0.5, %v1386
      %v1388 = vsub.f32 1.5, %v1387
      %v1389 = vmul.f32 %v1384, %v1388
      %vm1390 = vweird.f32 %v1238
      %vm1391 = vweird.f32 %v1384
      %vm1392 = vmor %vm1390, %vm1391
      %v1393 = vsel %vm1392, %v1384, %v1389
      %v1394 = vrsqrt.pop %v1239
      %v1395 = vmul.f32 %v1394, %v1239
      %v1396 = vmul.f32 %v1395, %v1394
      %v1397 = vmul.f32 0.5, %v1396
      %v1398 = vsub.f32 1.5, %v1397
      %v1399 = vmul.f32 %v1394, %v1398
      %vm1400 = vweird.f32 %v1239
      %vm1401 = vweird.f32 %v1394
      %vm1402 = vmor %vm1400, %vm1401
      %v1403 = vsel %vm1402, %v1394, %v1399
      %v1404 = vrsqrt.pop %v1240
      %v1405 = vmul.f32 %v1404, %v1240
      %v1406 = vmul.f32 %v1405, %v1404
      %v1407 = vmul.f32 0.5, %v1406
      %v1408 = vsub.f32 1.5, %v1407
      %v1409 = vmul.f32 %v1404, %v1408
      %vm1410 = vweird.f32 %v1240
      %vm1411 = vweird.f32 %v1404
      %vm1412 = vmor %vm1410, %vm1411
      %v1413 = vsel %vm1412, %v1404, %v1409
      %v1414 = vrsqrt.pop %v1241
      %v1415 = vmul.f32 %v1414, %v1241
      %v1416 = vmul.f32 %v1415, %v1414
      %v1417 = vmul.f32 0.5, %v1416
      %v1418 = vsub.f32 1.5, %v1417
      %v1419 = vmul.f32 %v1414, %v1418
      %vm1420 = vweird.f32 %v1241
      %vm1421 = vweird.f32 %v1414
      %vm1422 = vmor %vm1420, %vm1421
      %v1423 = vsel %vm1422, %v1414, %v1419
      %v1424 = vrsqrt.pop %v1242
      %v1425 = vmul.f32 %v1424, %v1242
      %v1426 = vmul.f32 %v1425, %v1424
      %v1427 = vmul.f32 0.5, %v1426
      %v1428 = vsub.f32 1.5, %v1427
      %v1429 = vmul.f32 %v1424, %v1428
      %vm1430 = vweird.f32 %v1242
      %vm1431 = vweird.f32 %v1424
      %vm1432 = vmor %vm1430, %vm1431
      %v1433 = vsel %vm1432, %v1424, %v1429
      %v1434 = vrsqrt.pop %v1243
      %v1435 = vmul.f32 %v1434, %v1243
      %v1436 = vmul.f32 %v1435, %v1434
      %v1437 = vmul.f32 0.5, %v1436
      %v1438 = vsub.f32 1.5, %v1437
      %v1439 = vmul.f32 %v1434, %v1438
      %vm1440 = vweird.f32 %v1243
      %vm1441 = vweird.f32 %v1434
      %vm1442 = vmor %vm1440, %vm1441
      %v1443 = vsel %vm1442, %v1434, %v1439
      %v1444 = vrsqrt.pop %v1244
      %v1445 = vmul.f32 %v1444, %v1244
      %v1446 = vmul.f32 %v1445, %v1444
      %v1447 = vmul.f32 0.5, %v1446
      %v1448 = vsub.f32 1.5, %v1447
      %v1449 = vmul.f32 %v1444, %v1448
      %vm1450 = vweird.f32 %v1244
      %vm1451 = vweird.f32 %v1444
      %vm1452 = vmor %vm1450, %vm1451
      %v1453 = vsel %vm1452, %v1444, %v1449
      %v1454 = vrsqrt.pop %v1245
      %v1455 = vmul.f32 %v1454, %v1245
      %v1456 = vmul.f32 %v1455, %v1454
      %v1457 = vmul.f32 0.5, %v1456
      %v1458 = vsub.f32 1.5, %v1457
      %v1459 = vmul.f32 %v1454, %v1458
      %vm1460 = vweird.f32 %v1245
      %vm1461 = vweird.f32 %v1454
      %vm1462 = vmor %vm1460, %vm1461
      %v1463 = vsel %vm1462, %v1454, %v1459
      %v1464 = vrsqrt.pop %v1246
      %v1465 = vmul.f32 %v1464, %v1246
      %v1466 = vmul.f32 %v1465, %v1464
      %v1467 = vmul.f32 0.5, %v1466
      %v1468 = vsub.f32 1.5, %v1467
      %v1469 = vmul.f32 %v1464, %v1468
      %vm1470 = vweird.f32 %v1246
      %vm1471 = vweird.f32 %v1464
      %vm1472 = vmor %vm1470, %vm1471
      %v1473 = vsel %vm1472, %v1464, %v1469
      %v1474 = vrsqrt.pop %v1247
      %v1475 = vmul.f32 %v1474, %v1247
      %v1476 = vmul.f32 %v1475, %v1474
      %v1477 = vmul.f32 0.5, %v1476
      %v1478 = vsub.f32 1.5, %v1477
      %v1479 = vmul.f32 %v1474, %v1478
      %vm1480 = vweird.f32 %v1247
      %vm1481 = vweird.f32 %v1474
      %vm1482 = vmor %vm1480, %vm1481
      %v1483 = vsel %vm1482, %v1474, %v1479
      %v1484 = vrsqrt.pop %v1248
      %v1485 = vmul.f32 %v1484, %v1248
      %v1486 = vmul.f32 %v1485, %v1484
      %v1487 = vmul.f32 0.5, %v1486
      %v1488 = vsub.f32 1.5, %v1487
      %v1489 = vmul.f32 %v1484, %v1488
      %vm1490 = vweird.f32 %v1248
      %vm1491 = vweird.f32 %v1484
      %vm1492 = vmor %vm1490, %vm1491
      %v1493 = vsel %vm1492, %v1484, %v1489
      %v1494 = vrsqrt.pop %v1249
      %v1495 = vmul.f32 %v1494, %v1249
      %v1496 = vmul.f32 %v1495, %v1494
      %v1497 = vmul.f32 0.5, %v1496
      %v1498 = vsub.f32 1.5, %v1497
      %v1499 = vmul.f32 %v1494, %v1498
      %vm1500 = vweird.f32 %v1249
      %vm1501 = vweird.f32 %v1494
      %vm1502 = vmor %vm1500, %vm1501
      %v1503 = vsel %vm1502, %v1494, %v1499
      %v1504 = vrsqrt.pop %v1250
      %v1505 = vmul.f32 %v1504, %v1250
      %v1506 = vmul.f32 %v1505, %v1504
      %v1507 = vmul.f32 0.5, %v1506
      %v1508 = vsub.f32 1.5, %v1507
      %v1509 = vmul.f32 %v1504, %v1508
      %vm1510 = vweird.f32 %v1250
      %vm1511 = vweird.f32 %v1504
      %vm1512 = vmor %vm1510, %vm1511
      %v1513 = vsel %vm1512, %v1504, %v1509
      %v1514 = vrsqrt.pop %v1251
      %v1515 = vmul.f32 %v1514, %v1251
      %v1516 = vmul.f32 %v1515, %v1514
      %v1517 = vmul.f32 0.5, %v1516
      %v1518 = vsub.f32 1.5, %v1517
      %v1519 = vmul.f32 %v1514, %v1518
      %vm1520 = vweird.f32 %v1251
      %vm1521 = vweird.f32 %v1514
      %vm1522 = vmor %vm1520, %vm1521
      %v1523 = vsel %vm1522, %v1514, %v1519
      %v1524 = vrsqrt.pop %v1252
      %v1525 = vmul.f32 %v1524, %v1252
      %v1526 = vmul.f32 %v1525, %v1524
      %v1527 = vmul.f32 0.5, %v1526
      %v1528 = vsub.f32 1.5, %v1527
      %v1529 = vmul.f32 %v1524, %v1528
      %vm1530 = vweird.f32 %v1252
      %vm1531 = vweird.f32 %v1524
      %vm1532 = vmor %vm1530, %vm1531
      %v1533 = vsel %vm1532, %v1524, %v1529
      %v1534 = vrsqrt.pop %v1253
      %v1535 = vmul.f32 %v1534, %v1253
      %v1536 = vmul.f32 %v1535, %v1534
      %v1537 = vmul.f32 0.5, %v1536
      %v1538 = vsub.f32 1.5, %v1537
      %v1539 = vmul.f32 %v1534, %v1538
      %vm1540 = vweird.f32 %v1253
      %vm1541 = vweird.f32 %v1534
      %vm1542 = vmor %vm1540, %vm1541
      %v1543 = vsel %vm1542, %v1534, %v1539
      %v1544 = vrsqrt.pop %v1254
      %v1545 = vmul.f32 %v1544, %v1254
      %v1546 = vmul.f32 %v1545, %v1544
      %v1547 = vmul.f32 0.5, %v1546
      %v1548 = vsub.f32 1.5, %v1547
      %v1549 = vmul.f32 %v1544, %v1548
      %vm1550 = vweird.f32 %v1254
      %vm1551 = vweird.f32 %v1544
      %vm1552 = vmor %vm1550, %vm1551
      %v1553 = vsel %vm1552, %v1544, %v1549
      %v1554 = vrsqrt.pop %v1255
      %v1555 = vmul.f32 %v1554, %v1255
      %v1556 = vmul.f32 %v1555, %v1554
      %v1557 = vmul.f32 0.5, %v1556
      %v1558 = vsub.f32 1.5, %v1557
      %v1559 = vmul.f32 %v1554, %v1558
      %vm1560 = vweird.f32 %v1255
      %vm1561 = vweird.f32 %v1554
      %vm1562 = vmor %vm1560, %vm1561
      %v1563 = vsel %vm1562, %v1554, %v1559
      %v1564 = vrsqrt.pop %v1256
      %v1565 = vmul.f32 %v1564, %v1256
      %v1566 = vmul.f32 %v1565, %v1564
      %v1567 = vmul.f32 0.5, %v1566
      %v1568 = vsub.f32 1.5, %v1567
      %v1569 = vmul.f32 %v1564, %v1568
      %vm1570 = vweird.f32 %v1256
      %vm1571 = vweird.f32 %v1564
      %vm1572 = vmor %vm1570, %vm1571
      %v1573 = vsel %vm1572, %v1564, %v1569
      %v1574 = vrsqrt.pop %v1257
      %v1575 = vmul.f32 %v1574, %v1257
      %v1576 = vmul.f32 %v1575, %v1574
      %v1577 = vmul.f32 0.5, %v1576
      %v1578 = vsub.f32 1.5, %v1577
      %v1579 = vmul.f32 %v1574, %v1578
      %vm1580 = vweird.f32 %v1257
      %vm1581 = vweird.f32 %v1574
      %vm1582 = vmor %vm1580, %vm1581
      %v1583 = vsel %vm1582, %v1574, %v1579
      %v1584 = vrsqrt.pop %v1258
      %v1585 = vmul.f32 %v1584, %v1258
      %v1586 = vmul.f32 %v1585, %v1584
      %v1587 = vmul.f32 0.5, %v1586
      %v1588 = vsub.f32 1.5, %v1587
      %v1589 = vmul.f32 %v1584, %v1588
      %vm1590 = vweird.f32 %v1258
      %vm1591 = vweird.f32 %v1584
      %vm1592 = vmor %vm1590, %vm1591
      %v1593 = vsel %vm1592, %v1584, %v1589
      %v1594 = vrsqrt.pop %v1259
      %v1595 = vmul.f32 %v1594, %v1259
      %v1596 = vmul.f32 %v1595, %v1594
      %v1597 = vmul.f32 0.5, %v1596
      %v1598 = vsub.f32 1.5, %v1597
      %v1599 = vmul.f32 %v1594, %v1598
      %vm1600 = vweird.f32 %v1259
      %vm1601 = vweird.f32 %v1594
      %vm1602 = vmor %vm1600, %vm1601
      %v1603 = vsel %vm1602, %v1594, %v1599
      %v1604 = vrsqrt.pop %v1260
      %v1605 = vmul.f32 %v1604, %v1260
      %v1606 = vmul.f32 %v1605, %v1604
      %v1607 = vmul.f32 0.5, %v1606
      %v1608 = vsub.f32 1.5, %v1607
      %v1609 = vmul.f32 %v1604, %v1608
      %vm1610 = vweird.f32 %v1260
      %vm1611 = vweird.f32 %v1604
      %vm1612 = vmor %vm1610, %vm1611
      %v1613 = vsel %vm1612, %v1604, %v1609
      %v1614 = vrsqrt.pop %v1261
      %v1615 = vmul.f32 %v1614, %v1261
      %v1616 = vmul.f32 %v1615, %v1614
      %v1617 = vmul.f32 0.5, %v1616
      %v1618 = vsub.f32 1.5, %v1617
      %v1619 = vmul.f32 %v1614, %v1618
      %vm1620 = vweird.f32 %v1261
      %vm1621 = vweird.f32 %v1614
      %vm1622 = vmor %vm1620, %vm1621
      %v1623 = vsel %vm1622, %v1614, %v1619
      %v1624 = vrsqrt.pop %v1262
      %v1625 = vmul.f32 %v1624, %v1262
      %v1626 = vmul.f32 %v1625, %v1624
      %v1627 = vmul.f32 0.5, %v1626
      %v1628 = vsub.f32 1.5, %v1627
      %v1629 = vmul.f32 %v1624, %v1628
      %vm1630 = vweird.f32 %v1262
      %vm1631 = vweird.f32 %v1624
      %vm1632 = vmor %vm1630, %vm1631
      %v1633 = vsel %vm1632, %v1624, %v1629
      %v1634 = vrsqrt.pop %v1263
      %v1635 = vmul.f32 %v1634, %v1263
      %v1636 = vmul.f32 %v1635, %v1634
      %v1637 = vmul.f32 0.5, %v1636
      %v1638 = vsub.f32 1.5, %v1637
      %v1639 = vmul.f32 %v1634, %v1638
      %vm1640 = vweird.f32 %v1263
      %vm1641 = vweird.f32 %v1634
      %vm1642 = vmor %vm1640, %vm1641
      %v1643 = vsel %vm1642, %v1634, %v1639
      %v1644 = vrsqrt.pop %v1264
      %v1645 = vmul.f32 %v1644, %v1264
      %v1646 = vmul.f32 %v1645, %v1644
      %v1647 = vmul.f32 0.5, %v1646
      %v1648 = vsub.f32 1.5, %v1647
      %v1649 = vmul.f32 %v1644, %v1648
      %vm1650 = vweird.f32 %v1264
      %vm1651 = vweird.f32 %v1644
      %vm1652 = vmor %vm1650, %vm1651
      %v1653 = vsel %vm1652, %v1644, %v1649
      %v1654 = vrsqrt.pop %v1265
      %v1655 = vmul.f32 %v1654, %v1265
      %v1656 = vmul.f32 %v1655, %v1654
      %v1657 = vmul.f32 0.5, %v1656
      %v1658 = vsub.f32 1.5, %v1657
      %v1659 = vmul.f32 %v1654, %v1658
      %vm1660 = vweird.f32 %v1265
      %vm1661 = vweird.f32 %v1654
      %vm1662 = vmor %vm1660, %vm1661
      %v1663 = vsel %vm1662, %v1654, %v1659
      %v1664 = vrsqrt.pop %v1266
      %v1665 = vmul.f32 %v1664, %v1266
      %v1666 = vmul.f32 %v1665, %v1664
      %v1667 = vmul.f32 0.5, %v1666
      %v1668 = vsub.f32 1.5, %v1667
      %v1669 = vmul.f32 %v1664, %v1668
      %vm1670 = vweird.f32 %v1266
      %vm1671 = vweird.f32 %v1664
      %vm1672 = vmor %vm1670, %vm1671
      %v1673 = vsel %vm1672, %v1664, %v1669
      %v1674 = vrsqrt.pop %v1267
      %v1675 = vmul.f32 %v1674, %v1267
      %v1676 = vmul.f32 %v1675, %v1674
      %v1677 = vmul.f32 0.5, %v1676
      %v1678 = vsub.f32 1.5, %v1677
      %v1679 = vmul.f32 %v1674, %v1678
      %vm1680 = vweird.f32 %v1267
      %vm1681 = vweird.f32 %v1674
      %vm1682 = vmor %vm1680, %vm1681
      %v1683 = vsel %vm1682, %v1674, %v1679
      %v1684 = vrsqrt.pop %v1268
      %v1685 = vmul.f32 %v1684, %v1268
      %v1686 = vmul.f32 %v1685, %v1684
      %v1687 = vmul.f32 0.5, %v1686
      %v1688 = vsub.f32 1.5, %v1687
      %v1689 = vmul.f32 %v1684, %v1688
      %vm1690 = vweird.f32 %v1268
      %vm1691 = vweird.f32 %v1684
      %vm1692 = vmor %vm1690, %vm1691
      %v1693 = vsel %vm1692, %v1684, %v1689
      %v1694 = vrsqrt.pop %v1269
      %v1695 = vmul.f32 %v1694, %v1269
      %v1696 = vmul.f32 %v1695, %v1694
      %v1697 = vmul.f32 0.5, %v1696
      %v1698 = vsub.f32 1.5, %v1697
      %v1699 = vmul.f32 %v1694, %v1698
      %vm1700 = vweird.f32 %v1269
      %vm1701 = vweird.f32 %v1694
      %vm1702 = vmor %vm1700, %vm1701
      %v1703 = vsel %vm1702, %v1694, %v1699
      %v1704 = vrsqrt.pop %v1270
      %v1705 = vmul.f32 %v1704, %v1270
      %v1706 = vmul.f32 %v1705, %v1704
      %v1707 = vmul.f32 0.5, %v1706
      %v1708 = vsub.f32 1.5, %v1707
      %v1709 = vmul.f32 %v1704, %v1708
      %vm1710 = vweird.f32 %v1270
      %vm1711 = vweird.f32 %v1704
      %vm1712 = vmor %vm1710, %vm1711
      %v1713 = vsel %vm1712, %v1704, %v1709
      %v1714 = vrsqrt.pop %v1271
      %v1715 = vmul.f32 %v1714, %v1271
      %v1716 = vmul.f32 %v1715, %v1714
      %v1717 = vmul.f32 0.5, %v1716
      %v1718 = vsub.f32 1.5, %v1717
      %v1719 = vmul.f32 %v1714, %v1718
      %vm1720 = vweird.f32 %v1271
      %vm1721 = vweird.f32 %v1714
      %vm1722 = vmor %vm1720, %vm1721
      %v1723 = vsel %vm1722, %v1714, %v1719
      %v1724 = vrsqrt.pop %v1272
      %v1725 = vmul.f32 %v1724, %v1272
      %v1726 = vmul.f32 %v1725, %v1724
      %v1727 = vmul.f32 0.5, %v1726
      %v1728 = vsub.f32 1.5, %v1727
      %v1729 = vmul.f32 %v1724, %v1728
      %vm1730 = vweird.f32 %v1272
      %vm1731 = vweird.f32 %v1724
      %vm1732 = vmor %vm1730, %vm1731
      %v1733 = vsel %vm1732, %v1724, %v1729
      %v1734 = vrsqrt.pop %v1273
      %v1735 = vmul.f32 %v1734, %v1273
      %v1736 = vmul.f32 %v1735, %v1734
      %v1737 = vmul.f32 0.5, %v1736
      %v1738 = vsub.f32 1.5, %v1737
      %v1739 = vmul.f32 %v1734, %v1738
      %vm1740 = vweird.f32 %v1273
      %vm1741 = vweird.f32 %v1734
      %vm1742 = vmor %vm1740, %vm1741
      %v1743 = vsel %vm1742, %v1734, %v1739
      %v1744 = vrsqrt.pop %v1274
      %v1745 = vmul.f32 %v1744, %v1274
      %v1746 = vmul.f32 %v1745, %v1744
      %v1747 = vmul.f32 0.5, %v1746
      %v1748 = vsub.f32 1.5, %v1747
      %v1749 = vmul.f32 %v1744, %v1748
      %vm1750 = vweird.f32 %v1274
      %vm1751 = vweird.f32 %v1744
      %vm1752 = vmor %vm1750, %vm1751
      %v1753 = vsel %vm1752, %v1744, %v1749
      %v1754 = vrsqrt.pop %v1275
      %v1755 = vmul.f32 %v1754, %v1275
      %v1756 = vmul.f32 %v1755, %v1754
      %v1757 = vmul.f32 0.5, %v1756
      %v1758 = vsub.f32 1.5, %v1757
      %v1759 = vmul.f32 %v1754, %v1758
      %vm1760 = vweird.f32 %v1275
      %vm1761 = vweird.f32 %v1754
      %vm1762 = vmor %vm1760, %vm1761
      %v1763 = vsel %vm1762, %v1754, %v1759
      %v1764 = vrsqrt.pop %v1276
      %v1765 = vmul.f32 %v1764, %v1276
      %v1766 = vmul.f32 %v1765, %v1764
      %v1767 = vmul.f32 0.5, %v1766
      %v1768 = vsub.f32 1.5, %v1767
      %v1769 = vmul.f32 %v1764, %v1768
      %vm1770 = vweird.f32 %v1276
      %vm1771 = vweird.f32 %v1764
      %vm1772 = vmor %vm1770, %vm1771
      %v1773 = vsel %vm1772, %v1764, %v1769
      %v1774 = vrsqrt.pop %v1277
      %v1775 = vmul.f32 %v1774, %v1277
      %v1776 = vmul.f32 %v1775, %v1774
      %v1777 = vmul.f32 0.5, %v1776
      %v1778 = vsub.f32 1.5, %v1777
      %v1779 = vmul.f32 %v1774, %v1778
      %vm1780 = vweird.f32 %v1277
      %vm1781 = vweird.f32 %v1774
      %vm1782 = vmor %vm1780, %vm1781
      %v1783 = vsel %vm1782, %v1774, %v1779
      %v1784 = vrsqrt.pop %v1278
      %v1785 = vmul.f32 %v1784, %v1278
      %v1786 = vmul.f32 %v1785, %v1784
      %v1787 = vmul.f32 0.5, %v1786
      %v1788 = vsub.f32 1.5, %v1787
      %v1789 = vmul.f32 %v1784, %v1788
      %vm1790 = vweird.f32 %v1278
      %vm1791 = vweird.f32 %v1784
      %vm1792 = vmor %vm1790, %vm1791
      %v1793 = vsel %vm1792, %v1784, %v1789
      %v1794 = vrsqrt.pop %v1279
      %v1795 = vmul.f32 %v1794, %v1279
      %v1796 = vmul.f32 %v1795, %v1794
      %v1797 = vmul.f32 0.5, %v1796
      %v1798 = vsub.f32 1.5, %v1797
      %v1799 = vmul.f32 %v1794, %v1798
      %vm1800 = vweird.f32 %v1279
      %vm1801 = vweird.f32 %v1794
      %vm1802 = vmor %vm1800, %vm1801
      %v1803 = vsel %vm1802, %v1794, %v1799
      %v1804 = vrsqrt.pop %v1280
      %v1805 = vmul.f32 %v1804, %v1280
      %v1806 = vmul.f32 %v1805, %v1804
      %v1807 = vmul.f32 0.5, %v1806
      %v1808 = vsub.f32 1.5, %v1807
      %v1809 = vmul.f32 %v1804, %v1808
      %vm1810 = vweird.f32 %v1280
      %vm1811 = vweird.f32 %v1804
      %vm1812 = vmor %vm1810, %vm1811
      %v1813 = vsel %vm1812, %v1804, %v1809
      %v1814 = vrsqrt.pop %v1281
      %v1815 = vmul.f32 %v1814, %v1281
      %v1816 = vmul.f32 %v1815, %v1814
      %v1817 = vmul.f32 0.5, %v1816
      %v1818 = vsub.f32 1.5, %v1817
      %v1819 = vmul.f32 %v1814, %v1818
      %vm1820 = vweird.f32 %v1281
      %vm1821 = vweird.f32 %v1814
      %vm1822 = vmor %vm1820, %vm1821
      %v1823 = vsel %vm1822, %v1814, %v1819
      %v1824 = vrsqrt.pop %v1282
      %v1825 = vmul.f32 %v1824, %v1282
      %v1826 = vmul.f32 %v1825, %v1824
      %v1827 = vmul.f32 0.5, %v1826
      %v1828 = vsub.f32 1.5, %v1827
      %v1829 = vmul.f32 %v1824, %v1828
      %vm1830 = vweird.f32 %v1282
      %vm1831 = vweird.f32 %v1824
      %vm1832 = vmor %vm1830, %vm1831
      %v1833 = vsel %vm1832, %v1824, %v1829
      %v1834 = vrsqrt.pop %v1283
      %v1835 = vmul.f32 %v1834, %v1283
      %v1836 = vmul.f32 %v1835, %v1834
      %v1837 = vmul.f32 0.5, %v1836
      %v1838 = vsub.f32 1.5, %v1837
      %v1839 = vmul.f32 %v1834, %v1838
      %vm1840 = vweird.f32 %v1283
      %vm1841 = vweird.f32 %v1834
      %vm1842 = vmor %vm1840, %vm1841
      %v1843 = vsel %vm1842, %v1834, %v1839
      %v1844 = vld [vmem:[%s260] sm:$0xff]
      %v1845 = vld [vmem:[%s260 + $0x8] sm:$0xff]
      %v1846 = vld [vmem:[%s260 + $0x10] sm:$0xff]
      %v1847 = vld [vmem:[%s260 + $0x18] sm:$0xff]
      %v1848 = vld [vmem:[%s260 + $0x20] sm:$0xff]
      %v1849 = vld [vmem:[%s260 + $0x28] sm:$0xff]
      %v1850 = vld [vmem:[%s260 + $0x30] sm:$0xff]
      %v1851 = vld [vmem:[%s260 + $0x38] sm:$0xff]
      %v1852 = vld [vmem:[%s260 + $0x40] sm:$0xff]
      %v1853 = vld [vmem:[%s260 + $0x48] sm:$0xff]
      %v1854 = vld [vmem:[%s260 + $0x50] sm:$0xff]
      %v1855 = vld [vmem:[%s260 + $0x58] sm:$0xff]
      %v1856 = vld [vmem:[%s260 + $0x60] sm:$0xff]
      %v1857 = vld [vmem:[%s260 + $0x68] sm:$0xff]
      %v1858 = vld [vmem:[%s260 + $0x70] sm:$0xff]
      %v1859 = vld [vmem:[%s260 + $0x78] sm:$0xff]
      %v1860 = vld [vmem:[%s260 + $0x80] sm:$0xff]
      %v1861 = vld [vmem:[%s260 + $0x88] sm:$0xff]
      %v1862 = vld [vmem:[%s260 + $0x90] sm:$0xff]
      %v1863 = vld [vmem:[%s260 + $0x98] sm:$0xff]
      %v1864 = vld [vmem:[%s260 + $0xa0] sm:$0xff]
      %v1865 = vld [vmem:[%s260 + $0xa8] sm:$0xff]
      %v1866 = vld [vmem:[%s260 + $0xb0] sm:$0xff]
      %v1867 = vld [vmem:[%s260 + $0xb8] sm:$0xff]
      %v1868 = vld [vmem:[%s260 + $0xc0] sm:$0xff]
      %v1869 = vld [vmem:[%s260 + $0xc8] sm:$0xff]
      %v1870 = vld [vmem:[%s260 + $0xd0] sm:$0xff]
      %v1871 = vld [vmem:[%s260 + $0xd8] sm:$0xff]
      %v1872 = vld [vmem:[%s260 + $0xe0] sm:$0xff]
      %v1873 = vld [vmem:[%s260 + $0xe8] sm:$0xff]
      %v1874 = vld [vmem:[%s260 + $0xf0] sm:$0xff]
      %v1875 = vld [vmem:[%s260 + $0xf8] sm:$0xff]
      %v1876 = vld [vmem:[%s260 + $0x100] sm:$0xff]
      %v1877 = vld [vmem:[%s260 + $0x108] sm:$0xff]
      %v1878 = vld [vmem:[%s260 + $0x110] sm:$0xff]
      %v1879 = vld [vmem:[%s260 + $0x118] sm:$0xff]
      %v1880 = vld [vmem:[%s260 + $0x120] sm:$0xff]
      %v1881 = vld [vmem:[%s260 + $0x128] sm:$0xff]
      %v1882 = vld [vmem:[%s260 + $0x130] sm:$0xff]
      %v1883 = vld [vmem:[%s260 + $0x138] sm:$0xff]
      %v1884 = vld [vmem:[%s260 + $0x140] sm:$0xff]
      %v1885 = vld [vmem:[%s260 + $0x148] sm:$0xff]
      %v1886 = vld [vmem:[%s260 + $0x150] sm:$0xff]
      %v1887 = vld [vmem:[%s260 + $0x158] sm:$0xff]
      %v1888 = vld [vmem:[%s260 + $0x160] sm:$0xff]
      %v1889 = vld [vmem:[%s260 + $0x168] sm:$0xff]
      %v1890 = vld [vmem:[%s260 + $0x170] sm:$0xff]
      %v1891 = vld [vmem:[%s260 + $0x178] sm:$0xff]
      %v1892 = vld [vmem:[%s260 + $0x180] sm:$0xff]
      %v1893 = vld [vmem:[%s260 + $0x188] sm:$0xff]
      %v1894 = vld [vmem:[%s260 + $0x190] sm:$0xff]
      %v1895 = vld [vmem:[%s260 + $0x198] sm:$0xff]
      %v1896 = vld [vmem:[%s260 + $0x1a0] sm:$0xff]
      %v1897 = vld [vmem:[%s260 + $0x1a8] sm:$0xff]
      %v1898 = vld [vmem:[%s260 + $0x1b0] sm:$0xff]
      %v1899 = vld [vmem:[%s260 + $0x1b8] sm:$0xff]
      %v1900 = vmul.f32 %v1293, %v1844
      %v1901 = vmul.f32 %v1303, %v1845
      %v1902 = vmul.f32 %v1313, %v1846
      %v1903 = vmul.f32 %v1323, %v1847
      %v1904 = vmul.f32 %v1333, %v1848
      %v1905 = vmul.f32 %v1343, %v1849
      %v1906 = vmul.f32 %v1353, %v1850
      %v1907 = vmul.f32 %v1363, %v1851
      %v1908 = vmul.f32 %v1373, %v1852
      %v1909 = vmul.f32 %v1383, %v1853
      %v1910 = vmul.f32 %v1393, %v1854
      %v1911 = vmul.f32 %v1403, %v1855
      %v1912 = vmul.f32 %v1413, %v1856
      %v1913 = vmul.f32 %v1423, %v1857
      %v1914 = vmul.f32 %v1433, %v1858
      %v1915 = vmul.f32 %v1443, %v1859
      %v1916 = vmul.f32 %v1453, %v1860
      %v1917 = vmul.f32 %v1463, %v1861
      %v1918 = vmul.f32 %v1473, %v1862
      %v1919 = vmul.f32 %v1483, %v1863
      %v1920 = vmul.f32 %v1493, %v1864
      %v1921 = vmul.f32 %v1503, %v1865
      %v1922 = vmul.f32 %v1513, %v1866
      %v1923 = vmul.f32 %v1523, %v1867
      %v1924 = vmul.f32 %v1533, %v1868
      %v1925 = vmul.f32 %v1543, %v1869
      %v1926 = vmul.f32 %v1553, %v1870
      %v1927 = vmul.f32 %v1563, %v1871
      %v1928 = vmul.f32 %v1573, %v1872
      %v1929 = vmul.f32 %v1583, %v1873
      %v1930 = vmul.f32 %v1593, %v1874
      %v1931 = vmul.f32 %v1603, %v1875
      %v1932 = vmul.f32 %v1613, %v1876
      %v1933 = vmul.f32 %v1623, %v1877
      %v1934 = vmul.f32 %v1633, %v1878
      %v1935 = vmul.f32 %v1643, %v1879
      %v1936 = vmul.f32 %v1653, %v1880
      %v1937 = vmul.f32 %v1663, %v1881
      %v1938 = vmul.f32 %v1673, %v1882
      %v1939 = vmul.f32 %v1683, %v1883
      %v1940 = vmul.f32 %v1693, %v1884
      %v1941 = vmul.f32 %v1703, %v1885
      %v1942 = vmul.f32 %v1713, %v1886
      %v1943 = vmul.f32 %v1723, %v1887
      %v1944 = vmul.f32 %v1733, %v1888
      %v1945 = vmul.f32 %v1743, %v1889
      %v1946 = vmul.f32 %v1753, %v1890
      %v1947 = vmul.f32 %v1763, %v1891
      %v1948 = vmul.f32 %v1773, %v1892
      %v1949 = vmul.f32 %v1783, %v1893
      %v1950 = vmul.f32 %v1793, %v1894
      %v1951 = vmul.f32 %v1803, %v1895
      %v1952 = vmul.f32 %v1813, %v1896
      %v1953 = vmul.f32 %v1823, %v1897
      %v1954 = vmul.f32 %v1833, %v1898
      %v1955 = vmul.f32 %v1843, %v1899
      %v1956 = vld [vmem:[%s266] sm:$0xff]
      %v1957 = vld [vmem:[%s266 + $0x8] sm:$0xff]
      %v1958 = vld [vmem:[%s266 + $0x10] sm:$0xff]
      %v1959 = vld [vmem:[%s266 + $0x18] sm:$0xff]
      %v1960 = vld [vmem:[%s266 + $0x20] sm:$0xff]
      %v1961 = vld [vmem:[%s266 + $0x28] sm:$0xff]
      %v1962 = vld [vmem:[%s266 + $0x30] sm:$0xff]
      %v1963 = vld [vmem:[%s266 + $0x38] sm:$0xff]
      %v1964 = vld [vmem:[%s266 + $0x40] sm:$0xff]
      %v1965 = vld [vmem:[%s266 + $0x48] sm:$0xff]
      %v1966 = vld [vmem:[%s266 + $0x50] sm:$0xff]
      %v1967 = vld [vmem:[%s266 + $0x58] sm:$0xff]
      %v1968 = vld [vmem:[%s266 + $0x60] sm:$0xff]
      %v1969 = vld [vmem:[%s266 + $0x68] sm:$0xff]
      %v1970 = vld [vmem:[%s266 + $0x70] sm:$0xff]
      %v1971 = vld [vmem:[%s266 + $0x78] sm:$0xff]
      %v1972 = vld [vmem:[%s266 + $0x80] sm:$0xff]
      %v1973 = vld [vmem:[%s266 + $0x88] sm:$0xff]
      %v1974 = vld [vmem:[%s266 + $0x90] sm:$0xff]
      %v1975 = vld [vmem:[%s266 + $0x98] sm:$0xff]
      %v1976 = vld [vmem:[%s266 + $0xa0] sm:$0xff]
      %v1977 = vld [vmem:[%s266 + $0xa8] sm:$0xff]
      %v1978 = vld [vmem:[%s266 + $0xb0] sm:$0xff]
      %v1979 = vld [vmem:[%s266 + $0xb8] sm:$0xff]
      %v1980 = vld [vmem:[%s266 + $0xc0] sm:$0xff]
      %v1981 = vld [vmem:[%s266 + $0xc8] sm:$0xff]
      %v1982 = vld [vmem:[%s266 + $0xd0] sm:$0xff]
      %v1983 = vld [vmem:[%s266 + $0xd8] sm:$0xff]
      %v1984 = vld [vmem:[%s266 + $0xe0] sm:$0xff]
      %v1985 = vld [vmem:[%s266 + $0xe8] sm:$0xff]
      %v1986 = vld [vmem:[%s266 + $0xf0] sm:$0xff]
      %v1987 = vld [vmem:[%s266 + $0xf8] sm:$0xff]
      %v1988 = vld [vmem:[%s266 + $0x100] sm:$0xff]
      %v1989 = vld [vmem:[%s266 + $0x108] sm:$0xff]
      %v1990 = vld [vmem:[%s266 + $0x110] sm:$0xff]
      %v1991 = vld [vmem:[%s266 + $0x118] sm:$0xff]
      %v1992 = vld [vmem:[%s266 + $0x120] sm:$0xff]
      %v1993 = vld [vmem:[%s266 + $0x128] sm:$0xff]
      %v1994 = vld [vmem:[%s266 + $0x130] sm:$0xff]
      %v1995 = vld [vmem:[%s266 + $0x138] sm:$0xff]
      %v1996 = vld [vmem:[%s266 + $0x140] sm:$0xff]
      %v1997 = vld [vmem:[%s266 + $0x148] sm:$0xff]
      %v1998 = vld [vmem:[%s266 + $0x150] sm:$0xff]
      %v1999 = vld [vmem:[%s266 + $0x158] sm:$0xff]
      %v2000 = vld [vmem:[%s266 + $0x160] sm:$0xff]
      %v2001 = vld [vmem:[%s266 + $0x168] sm:$0xff]
      %v2002 = vld [vmem:[%s266 + $0x170] sm:$0xff]
      %v2003 = vld [vmem:[%s266 + $0x178] sm:$0xff]
      %v2004 = vld [vmem:[%s266 + $0x180] sm:$0xff]
      %v2005 = vld [vmem:[%s266 + $0x188] sm:$0xff]
      %v2006 = vld [vmem:[%s266 + $0x190] sm:$0xff]
      %v2007 = vld [vmem:[%s266 + $0x198] sm:$0xff]
      %v2008 = vld [vmem:[%s266 + $0x1a0] sm:$0xff]
      %v2009 = vld [vmem:[%s266 + $0x1a8] sm:$0xff]
      %v2010 = vld [vmem:[%s266 + $0x1b0] sm:$0xff]
      %v2011 = vld [vmem:[%s266 + $0x1b8] sm:$0xff]
      %v2012 = vmul.f32 %v612, %v1900
      %v2013 = vmul.f32 %v613, %v1901
      %v2014 = vmul.f32 %v614, %v1902
      %v2015 = vmul.f32 %v615, %v1903
      %v2016 = vmul.f32 %v616, %v1904
      %v2017 = vmul.f32 %v617, %v1905
      %v2018 = vmul.f32 %v618, %v1906
      %v2019 = vmul.f32 %v619, %v1907
      %v2020 = vmul.f32 %v620, %v1908
      %v2021 = vmul.f32 %v621, %v1909
      %v2022 = vmul.f32 %v622, %v1910
      %v2023 = vmul.f32 %v623, %v1911
      %v2024 = vmul.f32 %v624, %v1912
      %v2025 = vmul.f32 %v625, %v1913
      %v2026 = vmul.f32 %v626, %v1914
      %v2027 = vmul.f32 %v627, %v1915
      %v2028 = vmul.f32 %v628, %v1916
      %v2029 = vmul.f32 %v629, %v1917
      %v2030 = vmul.f32 %v630, %v1918
      %v2031 = vmul.f32 %v631, %v1919
      %v2032 = vmul.f32 %v632, %v1920
      %v2033 = vmul.f32 %v633, %v1921
      %v2034 = vmul.f32 %v634, %v1922
      %v2035 = vmul.f32 %v635, %v1923
      %v2036 = vmul.f32 %v636, %v1924
      %v2037 = vmul.f32 %v637, %v1925
      %v2038 = vmul.f32 %v638, %v1926
      %v2039 = vmul.f32 %v639, %v1927
      %v2040 = vmul.f32 %v640, %v1928
      %v2041 = vmul.f32 %v641, %v1929
      %v2042 = vmul.f32 %v642, %v1930
      %v2043 = vmul.f32 %v643, %v1931
      %v2044 = vmul.f32 %v644, %v1932
      %v2045 = vmul.f32 %v645, %v1933
      %v2046 = vmul.f32 %v646, %v1934
      %v2047 = vmul.f32 %v647, %v1935
      %v2048 = vmul.f32 %v648, %v1936
      %v2049 = vmul.f32 %v649, %v1937
      %v2050 = vmul.f32 %v650, %v1938
      %v2051 = vmul.f32 %v651, %v1939
      %v2052 = vmul.f32 %v652, %v1940
      %v2053 = vmul.f32 %v653, %v1941
      %v2054 = vmul.f32 %v654, %v1942
      %v2055 = vmul.f32 %v655, %v1943
      %v2056 = vmul.f32 %v656, %v1944
      %v2057 = vmul.f32 %v657, %v1945
      %v2058 = vmul.f32 %v658, %v1946
      %v2059 = vmul.f32 %v659, %v1947
      %v2060 = vmul.f32 %v660, %v1948
      %v2061 = vmul.f32 %v661, %v1949
      %v2062 = vmul.f32 %v662, %v1950
      %v2063 = vmul.f32 %v663, %v1951
      %v2064 = vmul.f32 %v664, %v1952
      %v2065 = vmul.f32 %v665, %v1953
      %v2066 = vmul.f32 %v666, %v1954
      %v2067 = vmul.f32 %v667, %v1955
      %v2068 = vsub.f32 %v1956, %v2012
      %v2069 = vsub.f32 %v1957, %v2013
      %v2070 = vsub.f32 %v1958, %v2014
      %v2071 = vsub.f32 %v1959, %v2015
      %v2072 = vsub.f32 %v1960, %v2016
      %v2073 = vsub.f32 %v1961, %v2017
      %v2074 = vsub.f32 %v1962, %v2018
      %v2075 = vsub.f32 %v1963, %v2019
      %v2076 = vsub.f32 %v1964, %v2020
      %v2077 = vsub.f32 %v1965, %v2021
      %v2078 = vsub.f32 %v1966, %v2022
      %v2079 = vsub.f32 %v1967, %v2023
      %v2080 = vsub.f32 %v1968, %v2024
      %v2081 = vsub.f32 %v1969, %v2025
      %v2082 = vsub.f32 %v1970, %v2026
      %v2083 = vsub.f32 %v1971, %v2027
      %v2084 = vsub.f32 %v1972, %v2028
      %v2085 = vsub.f32 %v1973, %v2029
      %v2086 = vsub.f32 %v1974, %v2030
      %v2087 = vsub.f32 %v1975, %v2031
      %v2088 = vsub.f32 %v1976, %v2032
      %v2089 = vsub.f32 %v1977, %v2033
      %v2090 = vsub.f32 %v1978, %v2034
      %v2091 = vsub.f32 %v1979, %v2035
      %v2092 = vsub.f32 %v1980, %v2036
      %v2093 = vsub.f32 %v1981, %v2037
      %v2094 = vsub.f32 %v1982, %v2038
      %v2095 = vsub.f32 %v1983, %v2039
      %v2096 = vsub.f32 %v1984, %v2040
      %v2097 = vsub.f32 %v1985, %v2041
      %v2098 = vsub.f32 %v1986, %v2042
      %v2099 = vsub.f32 %v1987, %v2043
      %v2100 = vsub.f32 %v1988, %v2044
      %v2101 = vsub.f32 %v1989, %v2045
      %v2102 = vsub.f32 %v1990, %v2046
      %v2103 = vsub.f32 %v1991, %v2047
      %v2104 = vsub.f32 %v1992, %v2048
      %v2105 = vsub.f32 %v1993, %v2049
      %v2106 = vsub.f32 %v1994, %v2050
      %v2107 = vsub.f32 %v1995, %v2051
      %v2108 = vsub.f32 %v1996, %v2052
      %v2109 = vsub.f32 %v1997, %v2053
      %v2110 = vsub.f32 %v1998, %v2054
      %v2111 = vsub.f32 %v1999, %v2055
      %v2112 = vsub.f32 %v2000, %v2056
      %v2113 = vsub.f32 %v2001, %v2057
      %v2114 = vsub.f32 %v2002, %v2058
      %v2115 = vsub.f32 %v2003, %v2059
      %v2116 = vsub.f32 %v2004, %v2060
      %v2117 = vsub.f32 %v2005, %v2061
      %v2118 = vsub.f32 %v2006, %v2062
      %v2119 = vsub.f32 %v2007, %v2063
      %v2120 = vsub.f32 %v2008, %v2064
      %v2121 = vsub.f32 %v2009, %v2065
      %v2122 = vsub.f32 %v2010, %v2066
      %v2123 = vsub.f32 %v2011, %v2067
      %v2124 = vld [vmem:[%s254] sm:$0xff]
      %v2125 = vld [vmem:[%s254 + $0x8] sm:$0xff]
      %v2126 = vld [vmem:[%s254 + $0x10] sm:$0xff]
      %v2127 = vld [vmem:[%s254 + $0x18] sm:$0xff]
      %v2128 = vld [vmem:[%s254 + $0x20] sm:$0xff]
      %v2129 = vld [vmem:[%s254 + $0x28] sm:$0xff]
      %v2130 = vld [vmem:[%s254 + $0x30] sm:$0xff]
      %v2131 = vld [vmem:[%s254 + $0x38] sm:$0xff]
      %v2132 = vld [vmem:[%s254 + $0x40] sm:$0xff]
      %v2133 = vld [vmem:[%s254 + $0x48] sm:$0xff]
      %v2134 = vld [vmem:[%s254 + $0x50] sm:$0xff]
      %v2135 = vld [vmem:[%s254 + $0x58] sm:$0xff]
      %v2136 = vld [vmem:[%s254 + $0x60] sm:$0xff]
      %v2137 = vld [vmem:[%s254 + $0x68] sm:$0xff]
      %v2138 = vld [vmem:[%s254 + $0x70] sm:$0xff]
      %v2139 = vld [vmem:[%s254 + $0x78] sm:$0xff]
      %v2140 = vld [vmem:[%s254 + $0x80] sm:$0xff]
      %v2141 = vld [vmem:[%s254 + $0x88] sm:$0xff]
      %v2142 = vld [vmem:[%s254 + $0x90] sm:$0xff]
      %v2143 = vld [vmem:[%s254 + $0x98] sm:$0xff]
      %v2144 = vld [vmem:[%s254 + $0xa0] sm:$0xff]
      %v2145 = vld [vmem:[%s254 + $0xa8] sm:$0xff]
      %v2146 = vld [vmem:[%s254 + $0xb0] sm:$0xff]
      %v2147 = vld [vmem:[%s254 + $0xb8] sm:$0xff]
      %v2148 = vld [vmem:[%s254 + $0xc0] sm:$0xff]
      %v2149 = vld [vmem:[%s254 + $0xc8] sm:$0xff]
      %v2150 = vld [vmem:[%s254 + $0xd0] sm:$0xff]
      %v2151 = vld [vmem:[%s254 + $0xd8] sm:$0xff]
      %v2152 = vld [vmem:[%s254 + $0xe0] sm:$0xff]
      %v2153 = vld [vmem:[%s254 + $0xe8] sm:$0xff]
      %v2154 = vld [vmem:[%s254 + $0xf0] sm:$0xff]
      %v2155 = vld [vmem:[%s254 + $0xf8] sm:$0xff]
      %v2156 = vld [vmem:[%s254 + $0x100] sm:$0xff]
      %v2157 = vld [vmem:[%s254 + $0x108] sm:$0xff]
      %v2158 = vld [vmem:[%s254 + $0x110] sm:$0xff]
      %v2159 = vld [vmem:[%s254 + $0x118] sm:$0xff]
      %v2160 = vld [vmem:[%s254 + $0x120] sm:$0xff]
      %v2161 = vld [vmem:[%s254 + $0x128] sm:$0xff]
      %v2162 = vld [vmem:[%s254 + $0x130] sm:$0xff]
      %v2163 = vld [vmem:[%s254 + $0x138] sm:$0xff]
      %v2164 = vld [vmem:[%s254 + $0x140] sm:$0xff]
      %v2165 = vld [vmem:[%s254 + $0x148] sm:$0xff]
      %v2166 = vld [vmem:[%s254 + $0x150] sm:$0xff]
      %v2167 = vld [vmem:[%s254 + $0x158] sm:$0xff]
      %v2168 = vld [vmem:[%s254 + $0x160] sm:$0xff]
      %v2169 = vld [vmem:[%s254 + $0x168] sm:$0xff]
      %v2170 = vld [vmem:[%s254 + $0x170] sm:$0xff]
      %v2171 = vld [vmem:[%s254 + $0x178] sm:$0xff]
      %v2172 = vld [vmem:[%s254 + $0x180] sm:$0xff]
      %v2173 = vld [vmem:[%s254 + $0x188] sm:$0xff]
      %v2174 = vld [vmem:[%s254 + $0x190] sm:$0xff]
      %v2175 = vld [vmem:[%s254 + $0x198] sm:$0xff]
      %v2176 = vld [vmem:[%s254 + $0x1a0] sm:$0xff]
      %v2177 = vld [vmem:[%s254 + $0x1a8] sm:$0xff]
      %v2178 = vld [vmem:[%s254 + $0x1b0] sm:$0xff]
      %v2179 = vld [vmem:[%s254 + $0x1b8] sm:$0xff]
      %v2180 = vld [vmem:[%s254 + $0x1c0] sm:$0xff]
      %v2181 = vld [vmem:[%s254 + $0x1c8] sm:$0xff]
      %v2182 = vld [vmem:[%s254 + $0x1d0] sm:$0xff]
      %v2183 = vld [vmem:[%s254 + $0x1d8] sm:$0xff]
      %v2184 = vld [vmem:[%s254 + $0x1e0] sm:$0xff]
      %v2185 = vld [vmem:[%s254 + $0x1e8] sm:$0xff]
      %v2186 = vld [vmem:[%s254 + $0x1f0] sm:$0xff]
      %v2187 = vld [vmem:[%s254 + $0x1f8] sm:$0xff]
      %v2188 = vld [vmem:[%s254 + $0x200] sm:$0xff]
      %v2189 = vld [vmem:[%s254 + $0x208] sm:$0xff]
      %v2190 = vld [vmem:[%s254 + $0x210] sm:$0xff]
      %v2191 = vld [vmem:[%s254 + $0x218] sm:$0xff]
      %v2192 = vld [vmem:[%s254 + $0x220] sm:$0xff]
      %v2193 = vld [vmem:[%s254 + $0x228] sm:$0xff]
      %v2194 = vld [vmem:[%s254 + $0x230] sm:$0xff]
      %v2195 = vld [vmem:[%s254 + $0x238] sm:$0xff]
      %v2196 = vld [vmem:[%s254 + $0x240] sm:$0xff]
      %v2197 = vld [vmem:[%s254 + $0x248] sm:$0xff]
      %v2198 = vld [vmem:[%s254 + $0x250] sm:$0xff]
      %v2199 = vld [vmem:[%s254 + $0x258] sm:$0xff]
      %v2200 = vld [vmem:[%s254 + $0x260] sm:$0xff]
      %v2201 = vld [vmem:[%s254 + $0x268] sm:$0xff]
      %v2202 = vld [vmem:[%s254 + $0x270] sm:$0xff]
      %v2203 = vld [vmem:[%s254 + $0x278] sm:$0xff]
      %v2204 = vld [vmem:[%s254 + $0x280] sm:$0xff]
      %v2205 = vld [vmem:[%s254 + $0x288] sm:$0xff]
      %v2206 = vld [vmem:[%s254 + $0x290] sm:$0xff]
      %v2207 = vld [vmem:[%s254 + $0x298] sm:$0xff]
      %v2208 = vld [vmem:[%s254 + $0x2a0] sm:$0xff]
      %v2209 = vld [vmem:[%s254 + $0x2a8] sm:$0xff]
      %v2210 = vld [vmem:[%s254 + $0x2b0] sm:$0xff]
      %v2211 = vld [vmem:[%s254 + $0x2b8] sm:$0xff]
      %v2212 = vld [vmem:[%s254 + $0x2c0] sm:$0xff]
      %v2213 = vld [vmem:[%s254 + $0x2c8] sm:$0xff]
      %v2214 = vld [vmem:[%s254 + $0x2d0] sm:$0xff]
      %v2215 = vld [vmem:[%s254 + $0x2d8] sm:$0xff]
      %v2216 = vld [vmem:[%s254 + $0x2e0] sm:$0xff]
      %v2217 = vld [vmem:[%s254 + $0x2e8] sm:$0xff]
      %v2218 = vld [vmem:[%s254 + $0x2f0] sm:$0xff]
      %v2219 = vld [vmem:[%s254 + $0x2f8] sm:$0xff]
      %v2220 = vld [vmem:[%s254 + $0x300] sm:$0xff]
      %v2221 = vld [vmem:[%s254 + $0x308] sm:$0xff]
      %v2222 = vld [vmem:[%s254 + $0x310] sm:$0xff]
      %v2223 = vld [vmem:[%s254 + $0x318] sm:$0xff]
      %v2224 = vld [vmem:[%s254 + $0x320] sm:$0xff]
      %v2225 = vld [vmem:[%s254 + $0x328] sm:$0xff]
      %v2226 = vld [vmem:[%s254 + $0x330] sm:$0xff]
      %v2227 = vld [vmem:[%s254 + $0x338] sm:$0xff]
      %v2228 = vld [vmem:[%s254 + $0x340] sm:$0xff]
      %v2229 = vld [vmem:[%s254 + $0x348] sm:$0xff]
      %v2230 = vld [vmem:[%s254 + $0x350] sm:$0xff]
      %v2231 = vld [vmem:[%s254 + $0x358] sm:$0xff]
      %v2232 = vld [vmem:[%s254 + $0x360] sm:$0xff]
      %v2233 = vld [vmem:[%s254 + $0x368] sm:$0xff]
      %v2234 = vld [vmem:[%s254 + $0x370] sm:$0xff]
      %v2235 = vld [vmem:[%s254 + $0x378] sm:$0xff]
      %2237 = vset.pattern.permute.xlu0 0
      %2238 = vperm.xlu0 %2237, %v1900
      %v2239 = vpop.permute.xlu0 %2238
      %2242 = vset.pattern.permute.xlu0 0
      %2243 = vperm.xlu0 %2242, %v1901
      %v2244 = vpop.permute.xlu0 %2243
      %2247 = vset.pattern.permute.xlu0 0
      %2248 = vperm.xlu0 %2247, %v1902
      %v2249 = vpop.permute.xlu0 %2248
      %2252 = vset.pattern.permute.xlu0 0
      %2253 = vperm.xlu0 %2252, %v1903
      %v2254 = vpop.permute.xlu0 %2253
      %2257 = vset.pattern.permute.xlu0 0
      %2258 = vperm.xlu0 %2257, %v1904
      %v2259 = vpop.permute.xlu0 %2258
      %2262 = vset.pattern.permute.xlu0 0
      %2263 = vperm.xlu0 %2262, %v1905
      %v2264 = vpop.permute.xlu0 %2263
      %2267 = vset.pattern.permute.xlu0 0
      %2268 = vperm.xlu0 %2267, %v1906
      %v2269 = vpop.permute.xlu0 %2268
      %2272 = vset.pattern.permute.xlu0 0
      %2273 = vperm.xlu0 %2272, %v1907
      %v2274 = vpop.permute.xlu0 %2273
      %2277 = vset.pattern.permute.xlu0 0
      %2278 = vperm.xlu0 %2277, %v1908
      %v2279 = vpop.permute.xlu0 %2278
      %2282 = vset.pattern.permute.xlu0 0
      %2283 = vperm.xlu0 %2282, %v1909
      %v2284 = vpop.permute.xlu0 %2283
      %2287 = vset.pattern.permute.xlu0 0
      %2288 = vperm.xlu0 %2287, %v1910
      %v2289 = vpop.permute.xlu0 %2288
      %2292 = vset.pattern.permute.xlu0 0
      %2293 = vperm.xlu0 %2292, %v1911
      %v2294 = vpop.permute.xlu0 %2293
      %2297 = vset.pattern.permute.xlu0 0
      %2298 = vperm.xlu0 %2297, %v1912
      %v2299 = vpop.permute.xlu0 %2298
      %2302 = vset.pattern.permute.xlu0 0
      %2303 = vperm.xlu0 %2302, %v1913
      %v2304 = vpop.permute.xlu0 %2303
      %2307 = vset.pattern.permute.xlu0 0
      %2308 = vperm.xlu0 %2307, %v1914
      %v2309 = vpop.permute.xlu0 %2308
      %2312 = vset.pattern.permute.xlu0 0
      %2313 = vperm.xlu0 %2312, %v1915
      %v2314 = vpop.permute.xlu0 %2313
      %2317 = vset.pattern.permute.xlu0 0
      %2318 = vperm.xlu0 %2317, %v1916
      %v2319 = vpop.permute.xlu0 %2318
      %2322 = vset.pattern.permute.xlu0 0
      %2323 = vperm.xlu0 %2322, %v1917
      %v2324 = vpop.permute.xlu0 %2323
      %2327 = vset.pattern.permute.xlu0 0
      %2328 = vperm.xlu0 %2327, %v1918
      %v2329 = vpop.permute.xlu0 %2328
      %2332 = vset.pattern.permute.xlu0 0
      %2333 = vperm.xlu0 %2332, %v1919
      %v2334 = vpop.permute.xlu0 %2333
      %2337 = vset.pattern.permute.xlu0 0
      %2338 = vperm.xlu0 %2337, %v1920
      %v2339 = vpop.permute.xlu0 %2338
      %2342 = vset.pattern.permute.xlu0 0
      %2343 = vperm.xlu0 %2342, %v1921
      %v2344 = vpop.permute.xlu0 %2343
      %2347 = vset.pattern.permute.xlu0 0
      %2348 = vperm.xlu0 %2347, %v1922
      %v2349 = vpop.permute.xlu0 %2348
      %2352 = vset.pattern.permute.xlu0 0
      %2353 = vperm.xlu0 %2352, %v1923
      %v2354 = vpop.permute.xlu0 %2353
      %2357 = vset.pattern.permute.xlu0 0
      %2358 = vperm.xlu0 %2357, %v1924
      %v2359 = vpop.permute.xlu0 %2358
      %2362 = vset.pattern.permute.xlu0 0
      %2363 = vperm.xlu0 %2362, %v1925
      %v2364 = vpop.permute.xlu0 %2363
      %2367 = vset.pattern.permute.xlu0 0
      %2368 = vperm.xlu0 %2367, %v1926
      %v2369 = vpop.permute.xlu0 %2368
      %2372 = vset.pattern.permute.xlu0 0
      %2373 = vperm.xlu0 %2372, %v1927
      %v2374 = vpop.permute.xlu0 %2373
      %2377 = vset.pattern.permute.xlu0 0
      %2378 = vperm.xlu0 %2377, %v1928
      %v2379 = vpop.permute.xlu0 %2378
      %2382 = vset.pattern.permute.xlu0 0
      %2383 = vperm.xlu0 %2382, %v1929
      %v2384 = vpop.permute.xlu0 %2383
      %2387 = vset.pattern.permute.xlu0 0
      %2388 = vperm.xlu0 %2387, %v1930
      %v2389 = vpop.permute.xlu0 %2388
      %2392 = vset.pattern.permute.xlu0 0
      %2393 = vperm.xlu0 %2392, %v1931
      %v2394 = vpop.permute.xlu0 %2393
      %2397 = vset.pattern.permute.xlu0 0
      %2398 = vperm.xlu0 %2397, %v1932
      %v2399 = vpop.permute.xlu0 %2398
      %2402 = vset.pattern.permute.xlu0 0
      %2403 = vperm.xlu0 %2402, %v1933
      %v2404 = vpop.permute.xlu0 %2403
      %2407 = vset.pattern.permute.xlu0 0
      %2408 = vperm.xlu0 %2407, %v1934
      %v2409 = vpop.permute.xlu0 %2408
      %2412 = vset.pattern.permute.xlu0 0
      %2413 = vperm.xlu0 %2412, %v1935
      %v2414 = vpop.permute.xlu0 %2413
      %2417 = vset.pattern.permute.xlu0 0
      %2418 = vperm.xlu0 %2417, %v1936
      %v2419 = vpop.permute.xlu0 %2418
      %2422 = vset.pattern.permute.xlu0 0
      %2423 = vperm.xlu0 %2422, %v1937
      %v2424 = vpop.permute.xlu0 %2423
      %2427 = vset.pattern.permute.xlu0 0
      %2428 = vperm.xlu0 %2427, %v1938
      %v2429 = vpop.permute.xlu0 %2428
      %2432 = vset.pattern.permute.xlu0 0
      %2433 = vperm.xlu0 %2432, %v1939
      %v2434 = vpop.permute.xlu0 %2433
      %2437 = vset.pattern.permute.xlu0 0
      %2438 = vperm.xlu0 %2437, %v1940
      %v2439 = vpop.permute.xlu0 %2438
      %2442 = vset.pattern.permute.xlu0 0
      %2443 = vperm.xlu0 %2442, %v1941
      %v2444 = vpop.permute.xlu0 %2443
      %2447 = vset.pattern.permute.xlu0 0
      %2448 = vperm.xlu0 %2447, %v1942
      %v2449 = vpop.permute.xlu0 %2448
      %2452 = vset.pattern.permute.xlu0 0
      %2453 = vperm.xlu0 %2452, %v1943
      %v2454 = vpop.permute.xlu0 %2453
      %2457 = vset.pattern.permute.xlu0 0
      %2458 = vperm.xlu0 %2457, %v1944
      %v2459 = vpop.permute.xlu0 %2458
      %2462 = vset.pattern.permute.xlu0 0
      %2463 = vperm.xlu0 %2462, %v1945
      %v2464 = vpop.permute.xlu0 %2463
      %2467 = vset.pattern.permute.xlu0 0
      %2468 = vperm.xlu0 %2467, %v1946
      %v2469 = vpop.permute.xlu0 %2468
      %2472 = vset.pattern.permute.xlu0 0
      %2473 = vperm.xlu0 %2472, %v1947
      %v2474 = vpop.permute.xlu0 %2473
      %2477 = vset.pattern.permute.xlu0 0
      %2478 = vperm.xlu0 %2477, %v1948
      %v2479 = vpop.permute.xlu0 %2478
      %2482 = vset.pattern.permute.xlu0 0
      %2483 = vperm.xlu0 %2482, %v1949
      %v2484 = vpop.permute.xlu0 %2483
      %2487 = vset.pattern.permute.xlu0 0
      %2488 = vperm.xlu0 %2487, %v1950
      %v2489 = vpop.permute.xlu0 %2488
      %2492 = vset.pattern.permute.xlu0 0
      %2493 = vperm.xlu0 %2492, %v1951
      %v2494 = vpop.permute.xlu0 %2493
      %2497 = vset.pattern.permute.xlu0 0
      %2498 = vperm.xlu0 %2497, %v1952
      %v2499 = vpop.permute.xlu0 %2498
      %2502 = vset.pattern.permute.xlu0 0
      %2503 = vperm.xlu0 %2502, %v1953
      %v2504 = vpop.permute.xlu0 %2503
      %2507 = vset.pattern.permute.xlu0 0
      %2508 = vperm.xlu0 %2507, %v1954
      %v2509 = vpop.permute.xlu0 %2508
      %2512 = vset.pattern.permute.xlu0 0
      %2513 = vperm.xlu0 %2512, %v1955
      %v2514 = vpop.permute.xlu0 %2513
      %v2516 = vmul.f32 %v275, %v2239
      %v2517 = vmul.f32 %v276, %v2239
      %v2518 = vmul.f32 %v277, %v2244
      %v2519 = vmul.f32 %v278, %v2244
      %v2520 = vmul.f32 %v279, %v2249
      %v2521 = vmul.f32 %v280, %v2249
      %v2522 = vmul.f32 %v281, %v2254
      %v2523 = vmul.f32 %v282, %v2254
      %v2524 = vmul.f32 %v283, %v2259
      %v2525 = vmul.f32 %v284, %v2259
      %v2526 = vmul.f32 %v285, %v2264
      %v2527 = vmul.f32 %v286, %v2264
      %v2528 = vmul.f32 %v287, %v2269
      %v2529 = vmul.f32 %v288, %v2269
      %v2530 = vmul.f32 %v289, %v2274
      %v2531 = vmul.f32 %v290, %v2274
      %v2532 = vmul.f32 %v291, %v2279
      %v2533 = vmul.f32 %v292, %v2279
      %v2534 = vmul.f32 %v293, %v2284
      %v2535 = vmul.f32 %v294, %v2284
      %v2536 = vmul.f32 %v295, %v2289
      %v2537 = vmul.f32 %v296, %v2289
      %v2538 = vmul.f32 %v297, %v2294
      %v2539 = vmul.f32 %v298, %v2294
      %v2540 = vmul.f32 %v299, %v2299
      %v2541 = vmul.f32 %v300, %v2299
      %v2542 = vmul.f32 %v301, %v2304
      %v2543 = vmul.f32 %v302, %v2304
      %v2544 = vmul.f32 %v303, %v2309
      %v2545 = vmul.f32 %v304, %v2309
      %v2546 = vmul.f32 %v305, %v2314
      %v2547 = vmul.f32 %v306, %v2314
      %v2548 = vmul.f32 %v307, %v2319
      %v2549 = vmul.f32 %v308, %v2319
      %v2550 = vmul.f32 %v309, %v2324
      %v2551 = vmul.f32 %v310, %v2324
      %v2552 = vmul.f32 %v311, %v2329
      %v2553 = vmul.f32 %v312, %v2329
      %v2554 = vmul.f32 %v313, %v2334
      %v2555 = vmul.f32 %v314, %v2334
      %v2556 = vmul.f32 %v315, %v2339
      %v2557 = vmul.f32 %v316, %v2339
      %v2558 = vmul.f32 %v317, %v2344
      %v2559 = vmul.f32 %v318, %v2344
      %v2560 = vmul.f32 %v319, %v2349
      %v2561 = vmul.f32 %v320, %v2349
      %v2562 = vmul.f32 %v321, %v2354
      %v2563 = vmul.f32 %v322, %v2354
      %v2564 = vmul.f32 %v323, %v2359
      %v2565 = vmul.f32 %v324, %v2359
      %v2566 = vmul.f32 %v325, %v2364
      %v2567 = vmul.f32 %v326, %v2364
      %v2568 = vmul.f32 %v327, %v2369
      %v2569 = vmul.f32 %v328, %v2369
      %v2570 = vmul.f32 %v329, %v2374
      %v2571 = vmul.f32 %v330, %v2374
      %v2572 = vmul.f32 %v331, %v2379
      %v2573 = vmul.f32 %v332, %v2379
      %v2574 = vmul.f32 %v333, %v2384
      %v2575 = vmul.f32 %v334, %v2384
      %v2576 = vmul.f32 %v335, %v2389
      %v2577 = vmul.f32 %v336, %v2389
      %v2578 = vmul.f32 %v337, %v2394
      %v2579 = vmul.f32 %v338, %v2394
      %v2580 = vmul.f32 %v339, %v2399
      %v2581 = vmul.f32 %v340, %v2399
      %v2582 = vmul.f32 %v341, %v2404
      %v2583 = vmul.f32 %v342, %v2404
      %v2584 = vmul.f32 %v343, %v2409
      %v2585 = vmul.f32 %v344, %v2409
      %v2586 = vmul.f32 %v345, %v2414
      %v2587 = vmul.f32 %v346, %v2414
      %v2588 = vmul.f32 %v347, %v2419
      %v2589 = vmul.f32 %v348, %v2419
      %v2590 = vmul.f32 %v349, %v2424
      %v2591 = vmul.f32 %v350, %v2424
      %v2592 = vmul.f32 %v351, %v2429
      %v2593 = vmul.f32 %v352, %v2429
      %v2594 = vmul.f32 %v353, %v2434
      %v2595 = vmul.f32 %v354, %v2434
      %v2596 = vmul.f32 %v355, %v2439
      %v2597 = vmul.f32 %v356, %v2439
      %v2598 = vmul.f32 %v357, %v2444
      %v2599 = vmul.f32 %v358, %v2444
      %v2600 = vmul.f32 %v359, %v2449
      %v2601 = vmul.f32 %v360, %v2449
      %v2602 = vmul.f32 %v361, %v2454
      %v2603 = vmul.f32 %v362, %v2454
      %v2604 = vmul.f32 %v363, %v2459
      %v2605 = vmul.f32 %v364, %v2459
      %v2606 = vmul.f32 %v365, %v2464
      %v2607 = vmul.f32 %v366, %v2464
      %v2608 = vmul.f32 %v367, %v2469
      %v2609 = vmul.f32 %v368, %v2469
      %v2610 = vmul.f32 %v369, %v2474
      %v2611 = vmul.f32 %v370, %v2474
      %v2612 = vmul.f32 %v371, %v2479
      %v2613 = vmul.f32 %v372, %v2479
      %v2614 = vmul.f32 %v373, %v2484
      %v2615 = vmul.f32 %v374, %v2484
      %v2616 = vmul.f32 %v375, %v2489
      %v2617 = vmul.f32 %v376, %v2489
      %v2618 = vmul.f32 %v377, %v2494
      %v2619 = vmul.f32 %v378, %v2494
      %v2620 = vmul.f32 %v379, %v2499
      %v2621 = vmul.f32 %v380, %v2499
      %v2622 = vmul.f32 %v381, %v2504
      %v2623 = vmul.f32 %v382, %v2504
      %v2624 = vmul.f32 %v383, %v2509
      %v2625 = vmul.f32 %v384, %v2509
      %v2626 = vmul.f32 %v385, %v2514
      %v2627 = vmul.f32 %v386, %v2514
      %v2628 = vadd.f32 %v2124, %v2516
      %v2629 = vadd.f32 %v2125, %v2517
      %v2630 = vadd.f32 %v2126, %v2518
      %v2631 = vadd.f32 %v2127, %v2519
      %v2632 = vadd.f32 %v2128, %v2520
      %v2633 = vadd.f32 %v2129, %v2521
      %v2634 = vadd.f32 %v2130, %v2522
      %v2635 = vadd.f32 %v2131, %v2523
      %v2636 = vadd.f32 %v2132, %v2524
      %v2637 = vadd.f32 %v2133, %v2525
      %v2638 = vadd.f32 %v2134, %v2526
      %v2639 = vadd.f32 %v2135, %v2527
      %v2640 = vadd.f32 %v2136, %v2528
      %v2641 = vadd.f32 %v2137, %v2529
      %v2642 = vadd.f32 %v2138, %v2530
      %v2643 = vadd.f32 %v2139, %v2531
      %v2644 = vadd.f32 %v2140, %v2532
      %v2645 = vadd.f32 %v2141, %v2533
      %v2646 = vadd.f32 %v2142, %v2534
      %v2647 = vadd.f32 %v2143, %v2535
      %v2648 = vadd.f32 %v2144, %v2536
      %v2649 = vadd.f32 %v2145, %v2537
      %v2650 = vadd.f32 %v2146, %v2538
      %v2651 = vadd.f32 %v2147, %v2539
      %v2652 = vadd.f32 %v2148, %v2540
      %v2653 = vadd.f32 %v2149, %v2541
      %v2654 = vadd.f32 %v2150, %v2542
      %v2655 = vadd.f32 %v2151, %v2543
      %v2656 = vadd.f32 %v2152, %v2544
      %v2657 = vadd.f32 %v2153, %v2545
      %v2658 = vadd.f32 %v2154, %v2546
      %v2659 = vadd.f32 %v2155, %v2547
      %v2660 = vadd.f32 %v2156, %v2548
      %v2661 = vadd.f32 %v2157, %v2549
      %v2662 = vadd.f32 %v2158, %v2550
      %v2663 = vadd.f32 %v2159, %v2551
      %v2664 = vadd.f32 %v2160, %v2552
      %v2665 = vadd.f32 %v2161, %v2553
      %v2666 = vadd.f32 %v2162, %v2554
      %v2667 = vadd.f32 %v2163, %v2555
      %v2668 = vadd.f32 %v2164, %v2556
      %v2669 = vadd.f32 %v2165, %v2557
      %v2670 = vadd.f32 %v2166, %v2558
      %v2671 = vadd.f32 %v2167, %v2559
      %v2672 = vadd.f32 %v2168, %v2560
      %v2673 = vadd.f32 %v2169, %v2561
      %v2674 = vadd.f32 %v2170, %v2562
      %v2675 = vadd.f32 %v2171, %v2563
      %v2676 = vadd.f32 %v2172, %v2564
      %v2677 = vadd.f32 %v2173, %v2565
      %v2678 = vadd.f32 %v2174, %v2566
      %v2679 = vadd.f32 %v2175, %v2567
      %v2680 = vadd.f32 %v2176, %v2568
      %v2681 = vadd.f32 %v2177, %v2569
      %v2682 = vadd.f32 %v2178, %v2570
      %v2683 = vadd.f32 %v2179, %v2571
      %v2684 = vadd.f32 %v2180, %v2572
      %v2685 = vadd.f32 %v2181, %v2573
      %v2686 = vadd.f32 %v2182, %v2574
      %v2687 = vadd.f32 %v2183, %v2575
      %v2688 = vadd.f32 %v2184, %v2576
      %v2689 = vadd.f32 %v2185, %v2577
      %v2690 = vadd.f32 %v2186, %v2578
      %v2691 = vadd.f32 %v2187, %v2579
      %v2692 = vadd.f32 %v2188, %v2580
      %v2693 = vadd.f32 %v2189, %v2581
      %v2694 = vadd.f32 %v2190, %v2582
      %v2695 = vadd.f32 %v2191, %v2583
      %v2696 = vadd.f32 %v2192, %v2584
      %v2697 = vadd.f32 %v2193, %v2585
      %v2698 = vadd.f32 %v2194, %v2586
      %v2699 = vadd.f32 %v2195, %v2587
      %v2700 = vadd.f32 %v2196, %v2588
      %v2701 = vadd.f32 %v2197, %v2589
      %v2702 = vadd.f32 %v2198, %v2590
      %v2703 = vadd.f32 %v2199, %v2591
      %v2704 = vadd.f32 %v2200, %v2592
      %v2705 = vadd.f32 %v2201, %v2593
      %v2706 = vadd.f32 %v2202, %v2594
      %v2707 = vadd.f32 %v2203, %v2595
      %v2708 = vadd.f32 %v2204, %v2596
      %v2709 = vadd.f32 %v2205, %v2597
      %v2710 = vadd.f32 %v2206, %v2598
      %v2711 = vadd.f32 %v2207, %v2599
      %v2712 = vadd.f32 %v2208, %v2600
      %v2713 = vadd.f32 %v2209, %v2601
      %v2714 = vadd.f32 %v2210, %v2602
      %v2715 = vadd.f32 %v2211, %v2603
      %v2716 = vadd.f32 %v2212, %v2604
      %v2717 = vadd.f32 %v2213, %v2605
      %v2718 = vadd.f32 %v2214, %v2606
      %v2719 = vadd.f32 %v2215, %v2607
      %v2720 = vadd.f32 %v2216, %v2608
      %v2721 = vadd.f32 %v2217, %v2609
      %v2722 = vadd.f32 %v2218, %v2610
      %v2723 = vadd.f32 %v2219, %v2611
      %v2724 = vadd.f32 %v2220, %v2612
      %v2725 = vadd.f32 %v2221, %v2613
      %v2726 = vadd.f32 %v2222, %v2614
      %v2727 = vadd.f32 %v2223, %v2615
      %v2728 = vadd.f32 %v2224, %v2616
      %v2729 = vadd.f32 %v2225, %v2617
      %v2730 = vadd.f32 %v2226, %v2618
      %v2731 = vadd.f32 %v2227, %v2619
      %v2732 = vadd.f32 %v2228, %v2620
      %v2733 = vadd.f32 %v2229, %v2621
      %v2734 = vadd.f32 %v2230, %v2622
      %v2735 = vadd.f32 %v2231, %v2623
      %v2736 = vadd.f32 %v2232, %v2624
      %v2737 = vadd.f32 %v2233, %v2625
      %v2738 = vadd.f32 %v2234, %v2626
      %v2739 = vadd.f32 %v2235, %v2627
      %2741 = vset.pattern.permute.xlu0 0
      %2742 = vperm.xlu0 %2741, %v2068
      %v2743 = vpop.permute.xlu0 %2742
      %2746 = vset.pattern.permute.xlu0 0
      %2747 = vperm.xlu0 %2746, %v2069
      %v2748 = vpop.permute.xlu0 %2747
      %2751 = vset.pattern.permute.xlu0 0
      %2752 = vperm.xlu0 %2751, %v2070
      %v2753 = vpop.permute.xlu0 %2752
      %2756 = vset.pattern.permute.xlu0 0
      %2757 = vperm.xlu0 %2756, %v2071
      %v2758 = vpop.permute.xlu0 %2757
      %2761 = vset.pattern.permute.xlu0 0
      %2762 = vperm.xlu0 %2761, %v2072
      %v2763 = vpop.permute.xlu0 %2762
      %2766 = vset.pattern.permute.xlu0 0
      %2767 = vperm.xlu0 %2766, %v2073
      %v2768 = vpop.permute.xlu0 %2767
      %2771 = vset.pattern.permute.xlu0 0
      %2772 = vperm.xlu0 %2771, %v2074
      %v2773 = vpop.permute.xlu0 %2772
      %2776 = vset.pattern.permute.xlu0 0
      %2777 = vperm.xlu0 %2776, %v2075
      %v2778 = vpop.permute.xlu0 %2777
      %2781 = vset.pattern.permute.xlu0 0
      %2782 = vperm.xlu0 %2781, %v2076
      %v2783 = vpop.permute.xlu0 %2782
      %2786 = vset.pattern.permute.xlu0 0
      %2787 = vperm.xlu0 %2786, %v2077
      %v2788 = vpop.permute.xlu0 %2787
      %2791 = vset.pattern.permute.xlu0 0
      %2792 = vperm.xlu0 %2791, %v2078
      %v2793 = vpop.permute.xlu0 %2792
      %2796 = vset.pattern.permute.xlu0 0
      %2797 = vperm.xlu0 %2796, %v2079
      %v2798 = vpop.permute.xlu0 %2797
      %2801 = vset.pattern.permute.xlu0 0
      %2802 = vperm.xlu0 %2801, %v2080
      %v2803 = vpop.permute.xlu0 %2802
      %2806 = vset.pattern.permute.xlu0 0
      %2807 = vperm.xlu0 %2806, %v2081
      %v2808 = vpop.permute.xlu0 %2807
      %2811 = vset.pattern.permute.xlu0 0
      %2812 = vperm.xlu0 %2811, %v2082
      %v2813 = vpop.permute.xlu0 %2812
      %2816 = vset.pattern.permute.xlu0 0
      %2817 = vperm.xlu0 %2816, %v2083
      %v2818 = vpop.permute.xlu0 %2817
      %2821 = vset.pattern.permute.xlu0 0
      %2822 = vperm.xlu0 %2821, %v2084
      %v2823 = vpop.permute.xlu0 %2822
      %2826 = vset.pattern.permute.xlu0 0
      %2827 = vperm.xlu0 %2826, %v2085
      %v2828 = vpop.permute.xlu0 %2827
      %2831 = vset.pattern.permute.xlu0 0
      %2832 = vperm.xlu0 %2831, %v2086
      %v2833 = vpop.permute.xlu0 %2832
      %2836 = vset.pattern.permute.xlu0 0
      %2837 = vperm.xlu0 %2836, %v2087
      %v2838 = vpop.permute.xlu0 %2837
      %2841 = vset.pattern.permute.xlu0 0
      %2842 = vperm.xlu0 %2841, %v2088
      %v2843 = vpop.permute.xlu0 %2842
      %2846 = vset.pattern.permute.xlu0 0
      %2847 = vperm.xlu0 %2846, %v2089
      %v2848 = vpop.permute.xlu0 %2847
      %2851 = vset.pattern.permute.xlu0 0
      %2852 = vperm.xlu0 %2851, %v2090
      %v2853 = vpop.permute.xlu0 %2852
      %2856 = vset.pattern.permute.xlu0 0
      %2857 = vperm.xlu0 %2856, %v2091
      %v2858 = vpop.permute.xlu0 %2857
      %2861 = vset.pattern.permute.xlu0 0
      %2862 = vperm.xlu0 %2861, %v2092
      %v2863 = vpop.permute.xlu0 %2862
      %2866 = vset.pattern.permute.xlu0 0
      %2867 = vperm.xlu0 %2866, %v2093
      %v2868 = vpop.permute.xlu0 %2867
      %2871 = vset.pattern.permute.xlu0 0
      %2872 = vperm.xlu0 %2871, %v2094
      %v2873 = vpop.permute.xlu0 %2872
      %2876 = vset.pattern.permute.xlu0 0
      %2877 = vperm.xlu0 %2876, %v2095
      %v2878 = vpop.permute.xlu0 %2877
      %2881 = vset.pattern.permute.xlu0 0
      %2882 = vperm.xlu0 %2881, %v2096
      %v2883 = vpop.permute.xlu0 %2882
      %2886 = vset.pattern.permute.xlu0 0
      %2887 = vperm.xlu0 %2886, %v2097
      %v2888 = vpop.permute.xlu0 %2887
      %2891 = vset.pattern.permute.xlu0 0
      %2892 = vperm.xlu0 %2891, %v2098
      %v2893 = vpop.permute.xlu0 %2892
      %2896 = vset.pattern.permute.xlu0 0
      %2897 = vperm.xlu0 %2896, %v2099
      %v2898 = vpop.permute.xlu0 %2897
      %2901 = vset.pattern.permute.xlu0 0
      %2902 = vperm.xlu0 %2901, %v2100
      %v2903 = vpop.permute.xlu0 %2902
      %2906 = vset.pattern.permute.xlu0 0
      %2907 = vperm.xlu0 %2906, %v2101
      %v2908 = vpop.permute.xlu0 %2907
      %2911 = vset.pattern.permute.xlu0 0
      %2912 = vperm.xlu0 %2911, %v2102
      %v2913 = vpop.permute.xlu0 %2912
      %2916 = vset.pattern.permute.xlu0 0
      %2917 = vperm.xlu0 %2916, %v2103
      %v2918 = vpop.permute.xlu0 %2917
      %2921 = vset.pattern.permute.xlu0 0
      %2922 = vperm.xlu0 %2921, %v2104
      %v2923 = vpop.permute.xlu0 %2922
      %2926 = vset.pattern.permute.xlu0 0
      %2927 = vperm.xlu0 %2926, %v2105
      %v2928 = vpop.permute.xlu0 %2927
      %2931 = vset.pattern.permute.xlu0 0
      %2932 = vperm.xlu0 %2931, %v2106
      %v2933 = vpop.permute.xlu0 %2932
      %2936 = vset.pattern.permute.xlu0 0
      %2937 = vperm.xlu0 %2936, %v2107
      %v2938 = vpop.permute.xlu0 %2937
      %2941 = vset.pattern.permute.xlu0 0
      %2942 = vperm.xlu0 %2941, %v2108
      %v2943 = vpop.permute.xlu0 %2942
      %2946 = vset.pattern.permute.xlu0 0
      %2947 = vperm.xlu0 %2946, %v2109
      %v2948 = vpop.permute.xlu0 %2947
      %2951 = vset.pattern.permute.xlu0 0
      %2952 = vperm.xlu0 %2951, %v2110
      %v2953 = vpop.permute.xlu0 %2952
      %2956 = vset.pattern.permute.xlu0 0
      %2957 = vperm.xlu0 %2956, %v2111
      %v2958 = vpop.permute.xlu0 %2957
      %2961 = vset.pattern.permute.xlu0 0
      %2962 = vperm.xlu0 %2961, %v2112
      %v2963 = vpop.permute.xlu0 %2962
      %2966 = vset.pattern.permute.xlu0 0
      %2967 = vperm.xlu0 %2966, %v2113
      %v2968 = vpop.permute.xlu0 %2967
      %2971 = vset.pattern.permute.xlu0 0
      %2972 = vperm.xlu0 %2971, %v2114
      %v2973 = vpop.permute.xlu0 %2972
      %2976 = vset.pattern.permute.xlu0 0
      %2977 = vperm.xlu0 %2976, %v2115
      %v2978 = vpop.permute.xlu0 %2977
      %2981 = vset.pattern.permute.xlu0 0
      %2982 = vperm.xlu0 %2981, %v2116
      %v2983 = vpop.permute.xlu0 %2982
      %2986 = vset.pattern.permute.xlu0 0
      %2987 = vperm.xlu0 %2986, %v2117
      %v2988 = vpop.permute.xlu0 %2987
      %2991 = vset.pattern.permute.xlu0 0
      %2992 = vperm.xlu0 %2991, %v2118
      %v2993 = vpop.permute.xlu0 %2992
      %2996 = vset.pattern.permute.xlu0 0
      %2997 = vperm.xlu0 %2996, %v2119
      %v2998 = vpop.permute.xlu0 %2997
      %3001 = vset.pattern.permute.xlu0 0
      %3002 = vperm.xlu0 %3001, %v2120
      %v3003 = vpop.permute.xlu0 %3002
      %3006 = vset.pattern.permute.xlu0 0
      %3007 = vperm.xlu0 %3006, %v2121
      %v3008 = vpop.permute.xlu0 %3007
      %3011 = vset.pattern.permute.xlu0 0
      %3012 = vperm.xlu0 %3011, %v2122
      %v3013 = vpop.permute.xlu0 %3012
      %3016 = vset.pattern.permute.xlu0 0
      %3017 = vperm.xlu0 %3016, %v2123
      %v3018 = vpop.permute.xlu0 %3017
      %v3020 = vadd.f32 %v2628, %v2743
      %v3021 = vadd.f32 %v2629, %v2743
      %v3022 = vadd.f32 %v2630, %v2748
      %v3023 = vadd.f32 %v2631, %v2748
      %v3024 = vadd.f32 %v2632, %v2753
      %v3025 = vadd.f32 %v2633, %v2753
      %v3026 = vadd.f32 %v2634, %v2758
      %v3027 = vadd.f32 %v2635, %v2758
      %v3028 = vadd.f32 %v2636, %v2763
      %v3029 = vadd.f32 %v2637, %v2763
      %v3030 = vadd.f32 %v2638, %v2768
      %v3031 = vadd.f32 %v2639, %v2768
      %v3032 = vadd.f32 %v2640, %v2773
      %v3033 = vadd.f32 %v2641, %v2773
      %v3034 = vadd.f32 %v2642, %v2778
      %v3035 = vadd.f32 %v2643, %v2778
      %v3036 = vadd.f32 %v2644, %v2783
      %v3037 = vadd.f32 %v2645, %v2783
      %v3038 = vadd.f32 %v2646, %v2788
      %v3039 = vadd.f32 %v2647, %v2788
      %v3040 = vadd.f32 %v2648, %v2793
      %v3041 = vadd.f32 %v2649, %v2793
      %v3042 = vadd.f32 %v2650, %v2798
      %v3043 = vadd.f32 %v2651, %v2798
      %v3044 = vadd.f32 %v2652, %v2803
      %v3045 = vadd.f32 %v2653, %v2803
      %v3046 = vadd.f32 %v2654, %v2808
      %v3047 = vadd.f32 %v2655, %v2808
      %v3048 = vadd.f32 %v2656, %v2813
      %v3049 = vadd.f32 %v2657, %v2813
      %v3050 = vadd.f32 %v2658, %v2818
      %v3051 = vadd.f32 %v2659, %v2818
      %v3052 = vadd.f32 %v2660, %v2823
      %v3053 = vadd.f32 %v2661, %v2823
      %v3054 = vadd.f32 %v2662, %v2828
      %v3055 = vadd.f32 %v2663, %v2828
      %v3056 = vadd.f32 %v2664, %v2833
      %v3057 = vadd.f32 %v2665, %v2833
      %v3058 = vadd.f32 %v2666, %v2838
      %v3059 = vadd.f32 %v2667, %v2838
      %v3060 = vadd.f32 %v2668, %v2843
      %v3061 = vadd.f32 %v2669, %v2843
      %v3062 = vadd.f32 %v2670, %v2848
      %v3063 = vadd.f32 %v2671, %v2848
      %v3064 = vadd.f32 %v2672, %v2853
      %v3065 = vadd.f32 %v2673, %v2853
      %v3066 = vadd.f32 %v2674, %v2858
      %v3067 = vadd.f32 %v2675, %v2858
      %v3068 = vadd.f32 %v2676, %v2863
      %v3069 = vadd.f32 %v2677, %v2863
      %v3070 = vadd.f32 %v2678, %v2868
      %v3071 = vadd.f32 %v2679, %v2868
      %v3072 = vadd.f32 %v2680, %v2873
      %v3073 = vadd.f32 %v2681, %v2873
      %v3074 = vadd.f32 %v2682, %v2878
      %v3075 = vadd.f32 %v2683, %v2878
      %v3076 = vadd.f32 %v2684, %v2883
      %v3077 = vadd.f32 %v2685, %v2883
      %v3078 = vadd.f32 %v2686, %v2888
      %v3079 = vadd.f32 %v2687, %v2888
      %v3080 = vadd.f32 %v2688, %v2893
      %v3081 = vadd.f32 %v2689, %v2893
      %v3082 = vadd.f32 %v2690, %v2898
      %v3083 = vadd.f32 %v2691, %v2898
      %v3084 = vadd.f32 %v2692, %v2903
      %v3085 = vadd.f32 %v2693, %v2903
      %v3086 = vadd.f32 %v2694, %v2908
      %v3087 = vadd.f32 %v2695, %v2908
      %v3088 = vadd.f32 %v2696, %v2913
      %v3089 = vadd.f32 %v2697, %v2913
      %v3090 = vadd.f32 %v2698, %v2918
      %v3091 = vadd.f32 %v2699, %v2918
      %v3092 = vadd.f32 %v2700, %v2923
      %v3093 = vadd.f32 %v2701, %v2923
      %v3094 = vadd.f32 %v2702, %v2928
      %v3095 = vadd.f32 %v2703, %v2928
      %v3096 = vadd.f32 %v2704, %v2933
      %v3097 = vadd.f32 %v2705, %v2933
      %v3098 = vadd.f32 %v2706, %v2938
      %v3099 = vadd.f32 %v2707, %v2938
      %v3100 = vadd.f32 %v2708, %v2943
      %v3101 = vadd.f32 %v2709, %v2943
      %v3102 = vadd.f32 %v2710, %v2948
      %v3103 = vadd.f32 %v2711, %v2948
      %v3104 = vadd.f32 %v2712, %v2953
      %v3105 = vadd.f32 %v2713, %v2953
      %v3106 = vadd.f32 %v2714, %v2958
      %v3107 = vadd.f32 %v2715, %v2958
      %v3108 = vadd.f32 %v2716, %v2963
      %v3109 = vadd.f32 %v2717, %v2963
      %v3110 = vadd.f32 %v2718, %v2968
      %v3111 = vadd.f32 %v2719, %v2968
      %v3112 = vadd.f32 %v2720, %v2973
      %v3113 = vadd.f32 %v2721, %v2973
      %v3114 = vadd.f32 %v2722, %v2978
      %v3115 = vadd.f32 %v2723, %v2978
      %v3116 = vadd.f32 %v2724, %v2983
      %v3117 = vadd.f32 %v2725, %v2983
      %v3118 = vadd.f32 %v2726, %v2988
      %v3119 = vadd.f32 %v2727, %v2988
      %v3120 = vadd.f32 %v2728, %v2993
      %v3121 = vadd.f32 %v2729, %v2993
      %v3122 = vadd.f32 %v2730, %v2998
      %v3123 = vadd.f32 %v2731, %v2998
      %v3124 = vadd.f32 %v2732, %v3003
      %v3125 = vadd.f32 %v2733, %v3003
      %v3126 = vadd.f32 %v2734, %v3008
      %v3127 = vadd.f32 %v2735, %v3008
      %v3128 = vadd.f32 %v2736, %v3013
      %v3129 = vadd.f32 %v2737, %v3013
      %v3130 = vadd.f32 %v2738, %v3018
      %v3131 = vadd.f32 %v2739, %v3018
      %3132 = vst [vmem:[%s273] sm:$0xff] %v3020
      %3133 = vst.msk [vmem:[%s273 + $0x8] sm:$0xff] %vm387, %v3021
      %3134 = vst [vmem:[%s273 + $0x10] sm:$0xff] %v3022
      %3135 = vst.msk [vmem:[%s273 + $0x18] sm:$0xff] %vm387, %v3023
      %3136 = vst [vmem:[%s273 + $0x20] sm:$0xff] %v3024
      %3137 = vst.msk [vmem:[%s273 + $0x28] sm:$0xff] %vm387, %v3025
      %3138 = vst [vmem:[%s273 + $0x30] sm:$0xff] %v3026
      %3139 = vst.msk [vmem:[%s273 + $0x38] sm:$0xff] %vm387, %v3027
      %3140 = vst [vmem:[%s273 + $0x40] sm:$0xff] %v3028
      %3141 = vst.msk [vmem:[%s273 + $0x48] sm:$0xff] %vm387, %v3029
      %3142 = vst [vmem:[%s273 + $0x50] sm:$0xff] %v3030
      %3143 = vst.msk [vmem:[%s273 + $0x58] sm:$0xff] %vm387, %v3031
      %3144 = vst [vmem:[%s273 + $0x60] sm:$0xff] %v3032
      %3145 = vst.msk [vmem:[%s273 + $0x68] sm:$0xff] %vm387, %v3033
      %3146 = vst [vmem:[%s273 + $0x70] sm:$0xff] %v3034
      %3147 = vst.msk [vmem:[%s273 + $0x78] sm:$0xff] %vm387, %v3035
      %3148 = vst [vmem:[%s273 + $0x80] sm:$0xff] %v3036
      %3149 = vst.msk [vmem:[%s273 + $0x88] sm:$0xff] %vm387, %v3037
      %3150 = vst [vmem:[%s273 + $0x90] sm:$0xff] %v3038
      %3151 = vst.msk [vmem:[%s273 + $0x98] sm:$0xff] %vm387, %v3039
      %3152 = vst [vmem:[%s273 + $0xa0] sm:$0xff] %v3040
      %3153 = vst.msk [vmem:[%s273 + $0xa8] sm:$0xff] %vm387, %v3041
      %3154 = vst [vmem:[%s273 + $0xb0] sm:$0xff] %v3042
      %3155 = vst.msk [vmem:[%s273 + $0xb8] sm:$0xff] %vm387, %v3043
      %3156 = vst [vmem:[%s273 + $0xc0] sm:$0xff] %v3044
      %3157 = vst.msk [vmem:[%s273 + $0xc8] sm:$0xff] %vm387, %v3045
      %3158 = vst [vmem:[%s273 + $0xd0] sm:$0xff] %v3046
      %3159 = vst.msk [vmem:[%s273 + $0xd8] sm:$0xff] %vm387, %v3047
      %3160 = vst [vmem:[%s273 + $0xe0] sm:$0xff] %v3048
      %3161 = vst.msk [vmem:[%s273 + $0xe8] sm:$0xff] %vm387, %v3049
      %3162 = vst [vmem:[%s273 + $0xf0] sm:$0xff] %v3050
      %3163 = vst.msk [vmem:[%s273 + $0xf8] sm:$0xff] %vm387, %v3051
      %3164 = vst [vmem:[%s273 + $0x100] sm:$0xff] %v3052
      %3165 = vst.msk [vmem:[%s273 + $0x108] sm:$0xff] %vm387, %v3053
      %3166 = vst [vmem:[%s273 + $0x110] sm:$0xff] %v3054
      %3167 = vst.msk [vmem:[%s273 + $0x118] sm:$0xff] %vm387, %v3055
      %3168 = vst [vmem:[%s273 + $0x120] sm:$0xff] %v3056
      %3169 = vst.msk [vmem:[%s273 + $0x128] sm:$0xff] %vm387, %v3057
      %3170 = vst [vmem:[%s273 + $0x130] sm:$0xff] %v3058
      %3171 = vst.msk [vmem:[%s273 + $0x138] sm:$0xff] %vm387, %v3059
      %3172 = vst [vmem:[%s273 + $0x140] sm:$0xff] %v3060
      %3173 = vst.msk [vmem:[%s273 + $0x148] sm:$0xff] %vm387, %v3061
      %3174 = vst [vmem:[%s273 + $0x150] sm:$0xff] %v3062
      %3175 = vst.msk [vmem:[%s273 + $0x158] sm:$0xff] %vm387, %v3063
      %3176 = vst [vmem:[%s273 + $0x160] sm:$0xff] %v3064
      %3177 = vst.msk [vmem:[%s273 + $0x168] sm:$0xff] %vm387, %v3065
      %3178 = vst [vmem:[%s273 + $0x170] sm:$0xff] %v3066
      %3179 = vst.msk [vmem:[%s273 + $0x178] sm:$0xff] %vm387, %v3067
      %3180 = vst [vmem:[%s273 + $0x180] sm:$0xff] %v3068
      %3181 = vst.msk [vmem:[%s273 + $0x188] sm:$0xff] %vm387, %v3069
      %3182 = vst [vmem:[%s273 + $0x190] sm:$0xff] %v3070
      %3183 = vst.msk [vmem:[%s273 + $0x198] sm:$0xff] %vm387, %v3071
      %3184 = vst [vmem:[%s273 + $0x1a0] sm:$0xff] %v3072
      %3185 = vst.msk [vmem:[%s273 + $0x1a8] sm:$0xff] %vm387, %v3073
      %3186 = vst [vmem:[%s273 + $0x1b0] sm:$0xff] %v3074
      %3187 = vst.msk [vmem:[%s273 + $0x1b8] sm:$0xff] %vm387, %v3075
      %3188 = vst [vmem:[%s273 + $0x1c0] sm:$0xff] %v3076
      %3189 = vst.msk [vmem:[%s273 + $0x1c8] sm:$0xff] %vm387, %v3077
      %3190 = vst [vmem:[%s273 + $0x1d0] sm:$0xff] %v3078
      %3191 = vst.msk [vmem:[%s273 + $0x1d8] sm:$0xff] %vm387, %v3079
      %3192 = vst [vmem:[%s273 + $0x1e0] sm:$0xff] %v3080
      %3193 = vst.msk [vmem:[%s273 + $0x1e8] sm:$0xff] %vm387, %v3081
      %3194 = vst [vmem:[%s273 + $0x1f0] sm:$0xff] %v3082
      %3195 = vst.msk [vmem:[%s273 + $0x1f8] sm:$0xff] %vm387, %v3083
      %3196 = vst [vmem:[%s273 + $0x200] sm:$0xff] %v3084
      %3197 = vst.msk [vmem:[%s273 + $0x208] sm:$0xff] %vm387, %v3085
      %3198 = vst [vmem:[%s273 + $0x210] sm:$0xff] %v3086
      %3199 = vst.msk [vmem:[%s273 + $0x218] sm:$0xff] %vm387, %v3087
      %3200 = vst [vmem:[%s273 + $0x220] sm:$0xff] %v3088
      %3201 = vst.msk [vmem:[%s273 + $0x228] sm:$0xff] %vm387, %v3089
      %3202 = vst [vmem:[%s273 + $0x230] sm:$0xff] %v3090
      %3203 = vst.msk [vmem:[%s273 + $0x238] sm:$0xff] %vm387, %v3091
      %3204 = vst [vmem:[%s273 + $0x240] sm:$0xff] %v3092
      %3205 = vst.msk [vmem:[%s273 + $0x248] sm:$0xff] %vm387, %v3093
      %3206 = vst [vmem:[%s273 + $0x250] sm:$0xff] %v3094
      %3207 = vst.msk [vmem:[%s273 + $0x258] sm:$0xff] %vm387, %v3095
      %3208 = vst [vmem:[%s273 + $0x260] sm:$0xff] %v3096
      %3209 = vst.msk [vmem:[%s273 + $0x268] sm:$0xff] %vm387, %v3097
      %3210 = vst [vmem:[%s273 + $0x270] sm:$0xff] %v3098
      %3211 = vst.msk [vmem:[%s273 + $0x278] sm:$0xff] %vm387, %v3099
      %3212 = vst [vmem:[%s273 + $0x280] sm:$0xff] %v3100
      %3213 = vst.msk [vmem:[%s273 + $0x288] sm:$0xff] %vm387, %v3101
      %3214 = vst [vmem:[%s273 + $0x290] sm:$0xff] %v3102
      %3215 = vst.msk [vmem:[%s273 + $0x298] sm:$0xff] %vm387, %v3103
      %3216 = vst [vmem:[%s273 + $0x2a0] sm:$0xff] %v3104
      %3217 = vst.msk [vmem:[%s273 + $0x2a8] sm:$0xff] %vm387, %v3105
      %3218 = vst [vmem:[%s273 + $0x2b0] sm:$0xff] %v3106
      %3219 = vst.msk [vmem:[%s273 + $0x2b8] sm:$0xff] %vm387, %v3107
      %3220 = vst [vmem:[%s273 + $0x2c0] sm:$0xff] %v3108
      %3221 = vst.msk [vmem:[%s273 + $0x2c8] sm:$0xff] %vm387, %v3109
      %3222 = vst [vmem:[%s273 + $0x2d0] sm:$0xff] %v3110
      %3223 = vst.msk [vmem:[%s273 + $0x2d8] sm:$0xff] %vm387, %v3111
      %3224 = vst [vmem:[%s273 + $0x2e0] sm:$0xff] %v3112
      %3225 = vst.msk [vmem:[%s273 + $0x2e8] sm:$0xff] %vm387, %v3113
      %3226 = vst [vmem:[%s273 + $0x2f0] sm:$0xff] %v3114
      %3227 = vst.msk [vmem:[%s273 + $0x2f8] sm:$0xff] %vm387, %v3115
      %3228 = vst [vmem:[%s273 + $0x300] sm:$0xff] %v3116
      %3229 = vst.msk [vmem:[%s273 + $0x308] sm:$0xff] %vm387, %v3117
      %3230 = vst [vmem:[%s273 + $0x310] sm:$0xff] %v3118
      %3231 = vst.msk [vmem:[%s273 + $0x318] sm:$0xff] %vm387, %v3119
      %3232 = vst [vmem:[%s273 + $0x320] sm:$0xff] %v3120
      %3233 = vst.msk [vmem:[%s273 + $0x328] sm:$0xff] %vm387, %v3121
      %3234 = vst [vmem:[%s273 + $0x330] sm:$0xff] %v3122
      %3235 = vst.msk [vmem:[%s273 + $0x338] sm:$0xff] %vm387, %v3123
      %3236 = vst [vmem:[%s273 + $0x340] sm:$0xff] %v3124
      %3237 = vst.msk [vmem:[%s273 + $0x348] sm:$0xff] %vm387, %v3125
      %3238 = vst [vmem:[%s273 + $0x350] sm:$0xff] %v3126
      %3239 = vst.msk [vmem:[%s273 + $0x358] sm:$0xff] %vm387, %v3127
      %3240 = vst [vmem:[%s273 + $0x360] sm:$0xff] %v3128
      %3241 = vst.msk [vmem:[%s273 + $0x368] sm:$0xff] %vm387, %v3129
      %3242 = vst [vmem:[%s273 + $0x370] sm:$0xff] %v3130
      %3243 = vst.msk [vmem:[%s273 + $0x378] sm:$0xff] %vm387, %v3131
      %s3244 = smul.u32 56, %s15
      %p3245 = scmp.lt.s32.totalorder %s3244, 111
      %s3246 = scalar_select %p3245, %s3244, 111
      %s3247 = smul.addr %s3246, 2
      %s3248 = smul.addr %s3247, 8
      %s3249 = scalar_lea.vmem %s4, %s3248
      // Predicated region
      $region37: #{tpu_custom_call.1} parent=35 // pred_check
        %p3250 = pneg %p137
      $region38: #{tpu_custom_call.1} parent=35 // pred_check_branch
        %3252 = sbr.rel (%p3250) target = $region40
      $region39: #{tpu_custom_call.1} parent=35 // pred_region
        %s3253 = smul.u32 56, %s15
      $region40: #{tpu_custom_call.1} parent=35 // pred_fallthru
        _
    $region36: #{tpu_custom_call.1} parent=5 // pred_fallthru
      _
    %p3254 = scmp.le.s32.totalorder 2, %s10
    // Predicated region
    $region41: #{tpu_custom_call.1} parent=5 // pred_check
      %p3255 = pneg %p3254
    $region42: #{tpu_custom_call.1} parent=5 // pred_check_branch
      %3257 = sbr.rel (%p3255) target = $region44
    $region43: #{tpu_custom_call.1} parent=5 // pred_region
      %s3258 = ssub.s32 %s10, 2
      // Predicated region
      $region45: #{tpu_custom_call.1} parent=43 // pred_check
        %p3259 = pneg %p143
      $region46: #{tpu_custom_call.1} parent=43 // pred_check_branch
        %3261 = sbr.rel (%p3259) target = $region48
      $region47: #{tpu_custom_call.1} parent=43 // pred_region
        %s3262 = smul.u32 56, %s16
        %p3263 = scmp.lt.s32.totalorder %s3262, 111
        %s3264 = scalar_select %p3263, %s3262, 111
        %s3265 = smul.addr %s3264, 2
        %s3266 = smul.addr %s3265, 8
        %s3267 = scalar_lea.vmem %s4, %s3266
      $region48: #{tpu_custom_call.1} parent=43 // pred_fallthru
        _
    $region44: #{tpu_custom_call.1} parent=5 // pred_fallthru
      _
  $region6: #{tpu_custom_call.1} parent=0 // loop_footer
    %s14 = sadd.s32 1, %s10
  $region7: #{tpu_custom_call.1} parent=0 // loop_footer_branch
    %9 = sbr.rel target = $region3
  $region8: #{tpu_custom_call.1} parent=0 // loop_exit
    _

</llo_original>
